<compile_context>
chip_gen: v7x
topology: tpu7x:2x2x1
jax: 0.10.0
libtpu: 0.0.40
codegen_flags: <defaults>
</compile_context>

<pallas_src>
import math

import jax
import jax.numpy as jnp
from jax import lax
from jax.experimental import pallas as pl
from jax.experimental.pallas import tpu as pltpu


NEG_SLOPE = 0.01  # F.leaky_relu default negative_slope
LANE = 128


def _leaky_relu(x):
    return jnp.where(x > 0, x, NEG_SLOPE * x)


def _round_up(v, m):
    return ((v + m - 1) // m) * m


# ----------------------------------------------------------------------------
# Kernel
# ----------------------------------------------------------------------------
def fcn_kernel(x_ref, w1_ref, b1_ref, w2_ref, b2_ref,
               w3_ref, b3_ref, w4_ref, b4_ref, out_ref):
    """Fused forward pass for one batch tile.

    x_ref:  (TB, n)        f32  (cast to bf16 in-kernel)
    w1_ref: (n,  Hp)       bf16   b1_ref: (1, Hp) f32
    w2_ref: (Hp, Hp)       bf16   b2_ref: (1, Hp) f32
    w3_ref: (Hp, Np)       bf16   b3_ref: (1, Np) f32
    w4_ref: (1,  Np)       f32    b4_ref: (1, 1)  f32
    out_ref:(1, TB)        f32  (lane-dense row; wrapper reshapes to (B,))
    """
    cd = w1_ref.dtype  # MXU compute dtype (bf16)

    # In-kernel cast of the x tile (avoids a standalone HBM convert pass).
    x = x_ref[...].astype(cd)

    # Layers 1-3: bf16 MXU matmuls, f32 accumulation, f32 bias + leaky_relu.
    h = jnp.dot(x, w1_ref[...], preferred_element_type=jnp.float32) + b1_ref[...]
    h = _leaky_relu(h)

    h = jnp.dot(h.astype(cd), w2_ref[...],
                preferred_element_type=jnp.float32) + b2_ref[...]
    h = _leaky_relu(h)

    h = jnp.dot(h.astype(cd), w3_ref[...],
                preferred_element_type=jnp.float32) + b3_ref[...]
    h = _leaky_relu(h)

    # Layer 4 (n -> 1): contract over features, emitting the lane-dense
    # (1, TB) output row directly (no sublane->lane relayout).
    row = lax.dot_general(w4_ref[...], h, (((1,), (1,)), ((), ())),
                          preferred_element_type=jnp.float32)
    out_ref[...] = (row + b4_ref[...]).astype(out_ref.dtype)


# ----------------------------------------------------------------------------
# Parameter preparation (cast + zero-pad once, reuse across calls)
# ----------------------------------------------------------------------------
def prepare_params(params, *, compute_dtype=jnp.bfloat16, lane=LANE):
    """Cast weights to the MXU dtype and zero-pad hidden / output feature
    dims up to a multiple of 128 lanes. Exact: padded weight columns / bias
    entries are 0, leaky_relu(0)=0, and padded K columns contribute 0."""
    w1, b1, w2, b2, w3, b3, w4, b4 = params
    n_in, h = w1.shape
    n_out = w3.shape[1]
    h_pad = _round_up(h, lane)
    n_pad = _round_up(n_out, lane)

    def pad2(w, r, c):
        return jnp.pad(w, ((0, r - w.shape[0]), (0, c - w.shape[1])))

    w1_p = pad2(w1, n_in, h_pad).astype(compute_dtype)
    w2_p = pad2(w2, h_pad, h_pad).astype(compute_dtype)
    w3_p = pad2(w3, h_pad, n_pad).astype(compute_dtype)
    w4_p = jnp.pad(w4.reshape(1, -1),
                   ((0, 0), (0, n_pad - n_out))).astype(jnp.float32)
    b1_p = jnp.pad(b1.reshape(-1), (0, h_pad - h)).reshape(1, -1).astype(jnp.float32)
    b2_p = jnp.pad(b2.reshape(-1), (0, h_pad - h)).reshape(1, -1).astype(jnp.float32)
    b3_p = jnp.pad(b3.reshape(-1), (0, n_pad - n_out)).reshape(1, -1).astype(jnp.float32)
    b4_p = b4.reshape(1, 1).astype(jnp.float32)
    return (w1_p, b1_p, w2_p, b2_p, w3_p, b3_p, w4_p, b4_p)


# ----------------------------------------------------------------------------
# Generation-aware tiling
# ----------------------------------------------------------------------------
def _tpu_vmem_and_cores():
    """VMEM capacity and TensorCores-per-device, with conservative fallbacks."""
    vmem_bytes = 64 << 20   # conservative default (v7x per-TC VMEM)
    num_cores = 1
    try:
        vmem_bytes = int(pltpu.get_tpu_info().vmem_capacity_bytes)
    except Exception:
        pass
    try:
        kind = str(jax.devices()[0].device_kind).lower()
        # 2 TensorCores per device: v4 / v5p megacore, v7x.
        if ("v4" in kind) or ("v5p" in kind) or ("7" in kind):
            num_cores = 2
    except Exception:
        pass
    return vmem_bytes, num_cores


def _pick_tile_b(B, *, x_cols, h_pad, n_pad, vmem_bytes, num_cores):
    """Pick the batch tile size.

    Weights are single-buffered (Buffered(1)) and resident; the x tile (f32)
    and output row are double-buffered. On single-TC chips the grid is a
    serial loop, so we take the whole batch in one step when it fits; on
    multi-TC chips we target exactly one tile per TensorCore for small /
    medium problems.
    """
    budget = int(vmem_bytes * 0.7)
    # resident single-buffered weights (bf16) + f32 w4/biases
    weight_bytes = 2 * (x_cols * h_pad + h_pad * h_pad + h_pad * n_pad)
    weight_bytes += 4 * (n_pad + 2 * h_pad + n_pad + 1)
    # per-batch-row VMEM: x tile (f32, double-buffered) + f32/bf16 activation
    # live set + output row (double-buffered)
    per_row = 2 * 4 * x_cols + 6 * 4 * h_pad + 2 * 2 * h_pad + 4 * n_pad + 8

    cap = (budget - weight_bytes) // per_row
    if cap < 128:
        # Clamp instead of silently returning the full batch.
        # TODO(synk): K/N-tiled weight path needed when weights alone blow VMEM.
        cap = 128
    if num_cores >= 2 and B >= 2 * 128:
        # one tile per TensorCore; deeper splits are pure overhead here
        cap = min(cap, max(128, B // num_cores))

    tb = (min(int(cap), B) // 128) * 128
    if tb == 0:
        return B                      # tiny batch: single full tile
    while tb >= 128 and B % tb:
        tb -= 128
    if tb >= 128:
        return tb
    return B                          # odd small B: single full tile


# ----------------------------------------------------------------------------
# Wrapper
# ----------------------------------------------------------------------------
def _const_spec(shape):
    """Resident, single-buffered BlockSpec for weights/biases."""
    idx = lambda i: (0,) * len(shape)
    try:
        return pl.BlockSpec(shape, idx, pipeline_mode=pl.Buffered(1))
    except Exception:
        return pl.BlockSpec(shape, idx)


def fcn_forward(x, prepared_params, *, tile_b=None):
    """Run the fused FCN forward. `prepared_params` comes from
    prepare_params() (cast + padded once). Returns a 1-D array of shape (B,)."""
    B, n = x.shape
    w1_p, b1_p, w2_p, b2_p, w3_p, b3_p, w4_p, b4_p = prepared_params
    h_pad = w1_p.shape[1]
    n_pad = w3_p.shape[1]
    assert w1_p.shape[0] == n

    vmem_bytes, num_cores = _tpu_vmem_and_cores()
    if tile_b is None:
        tile_b = _pick_tile_b(B, x_cols=n, h_pad=h_pad, n_pad=n_pad,
                              vmem_bytes=vmem_bytes, num_cores=num_cores)
    assert B % tile_b == 0
    num_tiles = B // tile_b

    flops = 2 * B * (n * h_pad + h_pad * h_pad + h_pad * n_pad + n_pad)
    bytes_accessed = (B * n * 4                                    # x (f32)
                      + 2 * (n * h_pad + h_pad * h_pad + h_pad * n_pad)  # bf16 W
                      + 4 * (2 * h_pad + 2 * n_pad + 1)            # biases + w4
                      + B * 4)                                     # out

    out = pl.pallas_call(
        fcn_kernel,
        out_shape=jax.ShapeDtypeStruct((1, B), jnp.float32),
        grid=(num_tiles,),
        in_specs=[
            pl.BlockSpec((tile_b, n), lambda i: (i, 0)),   # x: tiled over batch
            _const_spec(w1_p.shape), _const_spec(b1_p.shape),
            _const_spec(w2_p.shape), _const_spec(b2_p.shape),
            _const_spec(w3_p.shape), _const_spec(b3_p.shape),
            _const_spec(w4_p.shape), _const_spec(b4_p.shape),
        ],
        # lane-dense output: one contiguous (1, tile_b) row per grid step
        out_specs=pl.BlockSpec((1, tile_b), lambda i: (0, i)),
        compiler_params=pltpu.CompilerParams(
            dimension_semantics=("parallel",),
            vmem_limit_bytes=min(100 << 20, int(vmem_bytes * 0.8)),
        ),
        cost_estimate=pl.CostEstimate(flops=flops, transcendentals=0,
                                      bytes_accessed=bytes_accessed),
    )(x, w1_p, b1_p, w2_p, b2_p, w3_p, b3_p, w4_p, b4_p)

    return out.reshape(-1)  # x.reshape(-1) in the PyTorch module


# ----------------------------------------------------------------------------
# Init + references
# ----------------------------------------------------------------------------
def init_fcn_params(key, n, width_coeff=2, dtype=jnp.float32):
    """Deterministic init matching the PyTorch module's __init__:
    xavier_uniform_ for weights, nn.Linear default bias init.
    Weights stored as [in, out] (transpose of PyTorch's [out, in])."""
    h = width_coeff * n
    dims = [(n, h), (h, h), (h, n), (n, 1)]
    params = []
    for (fan_in, fan_out) in dims:
        key, kw, kb = jax.random.split(key, 3)
        a = math.sqrt(6.0 / (fan_in + fan_out))
        w = jax.random.uniform(kw, (fan_in, fan_out), dtype, minval=-a, maxval=a)
        bb = 1.0 / math.sqrt(fan_in)
        b = jax.random.uniform(kb, (fan_out,), dtype, minval=-bb, maxval=bb)
        params.extend([w, b])
    return tuple(params)


def fcn_reference(x, params, compute_dtype=jnp.bfloat16):
    """Pure-JAX reference mimicking the kernel's precision (bf16 matmul
    operands, f32 accumulation / bias / leaky_relu, f32 final layer)."""
    w1, b1, w2, b2, w3, b3, w4, b4 = params
    cd = compute_dtype
    h = _leaky_relu(jnp.dot(x.astype(cd), w1.astype(cd),
                            preferred_element_type=jnp.float32) + b1)
    h = _leaky_relu(jnp.dot(h.astype(cd), w2.astype(cd),
                            preferred_element_type=jnp.float32) + b2)
    h = _leaky_relu(jnp.dot(h.astype(cd), w3.astype(cd),
                            preferred_element_type=jnp.float32) + b3)
    y = jnp.sum(h * w4.reshape(1, -1), axis=-1) + b4[0]
    return y


def fcn_reference_f32(x, params):
    """Full-f32 pure-JAX reference of the PyTorch forward (batch_norm=False)."""
    w1, b1, w2, b2, w3, b3, w4, b4 = params
    h = _leaky_relu(x @ w1 + b1)
    h = _leaky_relu(h @ w2 + b2)
    h = _leaky_relu(h @ w3 + b3)
    y = h @ w4 + b4
    return y.reshape(-1)


if __name__ == "__main__":
    key = jax.random.PRNGKey(0)
    kx, kp = jax.random.split(key)

    B, n = 512, 32   # n=32 -> hidden=64 (width_coeff=2); padded to 128 lanes
    x = jax.random.normal(kx, (B, n), jnp.float32)
    params = init_fcn_params(kp, n, width_coeff=2)

    # One-time cast + pad (reused for any number of forward calls).
    prepared = prepare_params(params)

    out = jax.block_until_ready(fcn_forward(x, prepared))
    assert out.shape == (B,)

    # tight check vs. a same-precision (bf16 operands, f32 accum) reference
    ref = fcn_reference(x, params)
    assert jnp.allclose(out, ref, atol=1e-3, rtol=1e-3), (out[:8], ref[:8])

    # loose sanity check vs. the full-f32 PyTorch-equivalent math
    ref32 = fcn_reference_f32(x, params)
    assert float(jnp.max(jnp.abs(out - ref32))) < 0.25

    print("KERNEL_OK")
</pallas_src>

<mosaic_0001>
module attributes {stable_mosaic.version = 11 : i64} {
  func.func @fcn_kernel(%arg0: i32, %arg1: memref<512x32xf32, #tpu.memory_space<vmem>>, %arg2: memref<32x128xbf16, #tpu.memory_space<vmem>>, %arg3: memref<1x128xf32, #tpu.memory_space<vmem>>, %arg4: memref<128x128xbf16, #tpu.memory_space<vmem>>, %arg5: memref<1x128xf32, #tpu.memory_space<vmem>>, %arg6: memref<128x128xbf16, #tpu.memory_space<vmem>>, %arg7: memref<1x128xf32, #tpu.memory_space<vmem>>, %arg8: memref<1x128xf32, #tpu.memory_space<vmem>>, %arg9: memref<1x1xf32, #tpu.memory_space<vmem>>, %arg10: memref<1x512xf32, #tpu.memory_space<vmem>>) attributes {dimension_semantics = [#tpu.dimension_semantics<parallel>], iteration_bounds = array<i64: 1>, scalar_prefetch = 0 : i64, scratch_operands = 0 : i64, tpu.core_type = #tpu.core_type<tc>, window_params = [{transform_indices = @transform_0, window_bounds = array<i64: 512, 32>}, {pipeline_mode = #tpu.pipeline_mode<synchronous>, transform_indices = @transform_1, window_bounds = array<i64: 32, 128>}, {pipeline_mode = #tpu.pipeline_mode<synchronous>, transform_indices = @transform_2, window_bounds = array<i64: 1, 128>}, {pipeline_mode = #tpu.pipeline_mode<synchronous>, transform_indices = @transform_3, window_bounds = array<i64: 128, 128>}, {pipeline_mode = #tpu.pipeline_mode<synchronous>, transform_indices = @transform_4, window_bounds = array<i64: 1, 128>}, {pipeline_mode = #tpu.pipeline_mode<synchronous>, transform_indices = @transform_5, window_bounds = array<i64: 128, 128>}, {pipeline_mode = #tpu.pipeline_mode<synchronous>, transform_indices = @transform_6, window_bounds = array<i64: 1, 128>}, {pipeline_mode = #tpu.pipeline_mode<synchronous>, transform_indices = @transform_7, window_bounds = array<i64: 1, 128>}, {pipeline_mode = #tpu.pipeline_mode<synchronous>, transform_indices = @transform_8, window_bounds = array<i64: 1, 1>}, {transform_indices = @transform_9, window_bounds = array<i64: 1, 512>}]} {
    %c0 = arith.constant 0 : index
    %c0_0 = arith.constant 0 : index
    %0 = vector.load %arg1[%c0, %c0_0] : memref<512x32xf32, #tpu.memory_space<vmem>>, vector<512x32xf32>
    %1 = arith.truncf %0 : vector<512x32xf32> to vector<512x32xbf16>
    %c0_1 = arith.constant 0 : index
    %c0_2 = arith.constant 0 : index
    %2 = vector.load %arg2[%c0_1, %c0_2] : memref<32x128xbf16, #tpu.memory_space<vmem>>, vector<32x128xbf16>
    %cst = arith.constant dense<0.000000e+00> : vector<512x128xf32>
    %3 = tpu.matmul %1, %2, %cst {dimension_numbers = #tpu.dot_dimension_numbers<[1], [0], [0], [1], [0, 0, 1, 1], [], []>} : vector<512x32xbf16>, vector<32x128xbf16>, vector<512x128xf32> -> vector<512x128xf32>
    %c0_3 = arith.constant 0 : index
    %c0_4 = arith.constant 0 : index
    %4 = vector.load %arg3[%c0_3, %c0_4] : memref<1x128xf32, #tpu.memory_space<vmem>>, vector<1x128xf32>
    %5 = vector.broadcast %4 : vector<1x128xf32> to vector<512x128xf32>
    %6 = arith.addf %3, %5 : vector<512x128xf32>
    %cst_5 = arith.constant 0.000000e+00 : f32
    %7 = vector.broadcast %cst_5 : f32 to vector<512x128xf32>
    %8 = arith.cmpf ogt, %6, %7 : vector<512x128xf32>
    %cst_6 = arith.constant 0.00999999977 : f32
    %9 = vector.broadcast %cst_6 : f32 to vector<512x128xf32>
    %10 = arith.mulf %9, %6 : vector<512x128xf32>
    %11 = arith.select %8, %6, %10 : vector<512x128xi1>, vector<512x128xf32>
    %12 = arith.truncf %11 : vector<512x128xf32> to vector<512x128xbf16>
    %c0_7 = arith.constant 0 : index
    %c0_8 = arith.constant 0 : index
    %13 = vector.load %arg4[%c0_7, %c0_8] : memref<128x128xbf16, #tpu.memory_space<vmem>>, vector<128x128xbf16>
    %cst_9 = arith.constant dense<0.000000e+00> : vector<512x128xf32>
    %14 = tpu.matmul %12, %13, %cst_9 {dimension_numbers = #tpu.dot_dimension_numbers<[1], [0], [0], [1], [0, 0, 1, 1], [], []>} : vector<512x128xbf16>, vector<128x128xbf16>, vector<512x128xf32> -> vector<512x128xf32>
    %c0_10 = arith.constant 0 : index
    %c0_11 = arith.constant 0 : index
    %15 = vector.load %arg5[%c0_10, %c0_11] : memref<1x128xf32, #tpu.memory_space<vmem>>, vector<1x128xf32>
    %16 = vector.broadcast %15 : vector<1x128xf32> to vector<512x128xf32>
    %17 = arith.addf %14, %16 : vector<512x128xf32>
    %cst_12 = arith.constant 0.000000e+00 : f32
    %18 = vector.broadcast %cst_12 : f32 to vector<512x128xf32>
    %19 = arith.cmpf ogt, %17, %18 : vector<512x128xf32>
    %cst_13 = arith.constant 0.00999999977 : f32
    %20 = vector.broadcast %cst_13 : f32 to vector<512x128xf32>
    %21 = arith.mulf %20, %17 : vector<512x128xf32>
    %22 = arith.select %19, %17, %21 : vector<512x128xi1>, vector<512x128xf32>
    %23 = arith.truncf %22 : vector<512x128xf32> to vector<512x128xbf16>
    %c0_14 = arith.constant 0 : index
    %c0_15 = arith.constant 0 : index
    %24 = vector.load %arg6[%c0_14, %c0_15] : memref<128x128xbf16, #tpu.memory_space<vmem>>, vector<128x128xbf16>
    %cst_16 = arith.constant dense<0.000000e+00> : vector<512x128xf32>
    %25 = tpu.matmul %23, %24, %cst_16 {dimension_numbers = #tpu.dot_dimension_numbers<[1], [0], [0], [1], [0, 0, 1, 1], [], []>} : vector<512x128xbf16>, vector<128x128xbf16>, vector<512x128xf32> -> vector<512x128xf32>
    %c0_17 = arith.constant 0 : index
    %c0_18 = arith.constant 0 : index
    %26 = vector.load %arg7[%c0_17, %c0_18] : memref<1x128xf32, #tpu.memory_space<vmem>>, vector<1x128xf32>
    %27 = vector.broadcast %26 : vector<1x128xf32> to vector<512x128xf32>
    %28 = arith.addf %25, %27 : vector<512x128xf32>
    %cst_19 = arith.constant 0.000000e+00 : f32
    %29 = vector.broadcast %cst_19 : f32 to vector<512x128xf32>
    %30 = arith.cmpf ogt, %28, %29 : vector<512x128xf32>
    %cst_20 = arith.constant 0.00999999977 : f32
    %31 = vector.broadcast %cst_20 : f32 to vector<512x128xf32>
    %32 = arith.mulf %31, %28 : vector<512x128xf32>
    %33 = arith.select %30, %28, %32 : vector<512x128xi1>, vector<512x128xf32>
    %c0_21 = arith.constant 0 : index
    %c0_22 = arith.constant 0 : index
    %34 = vector.load %arg8[%c0_21, %c0_22] : memref<1x128xf32, #tpu.memory_space<vmem>>, vector<1x128xf32>
    %cst_23 = arith.constant dense<0.000000e+00> : vector<1x512xf32>
    %35 = tpu.matmul %34, %33, %cst_23 {dimension_numbers = #tpu.dot_dimension_numbers<[1], [1], [0], [0], [0, 0, 1, 0], [], []>} : vector<1x128xf32>, vector<512x128xf32>, vector<1x512xf32> -> vector<1x512xf32>
    %c0_24 = arith.constant 0 : index
    %c0_25 = arith.constant 0 : index
    %36 = vector.load %arg9[%c0_24, %c0_25] : memref<1x1xf32, #tpu.memory_space<vmem>>, vector<1x1xf32>
    %37 = vector.broadcast %36 : vector<1x1xf32> to vector<1x512xf32>
    %38 = arith.addf %35, %37 : vector<1x512xf32>
    %c0_26 = arith.constant 0 : index
    %c0_27 = arith.constant 0 : index
    %39 = vector.load %arg10[%c0_26, %c0_27] : memref<1x512xf32, #tpu.memory_space<vmem>>, vector<1x512xf32>
    tpu.vector_store %arg10[%c0_26, %c0_27], %38 {strides = array<i32>} : memref<1x512xf32, #tpu.memory_space<vmem>>, vector<1x512xf32>,
    return
  }
  func.func @transform_0(%arg0: i32) -> (i32, i32) {
    %c0_i32 = arith.constant 0 : i32
    %c0_i32_0 = arith.constant 0 : i32
    return %arg0, %c0_i32 : i32, i32
  }
  func.func @transform_1(%arg0: i32) -> (i32, i32) {
    %c0_i32 = arith.constant 0 : i32
    %c0_i32_0 = arith.constant 0 : i32
    %c0_i32_1 = arith.constant 0 : i32
    return %c0_i32, %c0_i32_0 : i32, i32
  }
  func.func @transform_2(%arg0: i32) -> (i32, i32) {
    %c0_i32 = arith.constant 0 : i32
    %c0_i32_0 = arith.constant 0 : i32
    %c0_i32_1 = arith.constant 0 : i32
    return %c0_i32, %c0_i32_0 : i32, i32
  }
  func.func @transform_3(%arg0: i32) -> (i32, i32) {
    %c0_i32 = arith.constant 0 : i32
    %c0_i32_0 = arith.constant 0 : i32
    %c0_i32_1 = arith.constant 0 : i32
    return %c0_i32, %c0_i32_0 : i32, i32
  }
  func.func @transform_4(%arg0: i32) -> (i32, i32) {
    %c0_i32 = arith.constant 0 : i32
    %c0_i32_0 = arith.constant 0 : i32
    %c0_i32_1 = arith.constant 0 : i32
    return %c0_i32, %c0_i32_0 : i32, i32
  }
  func.func @transform_5(%arg0: i32) -> (i32, i32) {
    %c0_i32 = arith.constant 0 : i32
    %c0_i32_0 = arith.constant 0 : i32
    %c0_i32_1 = arith.constant 0 : i32
    return %c0_i32, %c0_i32_0 : i32, i32
  }
  func.func @transform_6(%arg0: i32) -> (i32, i32) {
    %c0_i32 = arith.constant 0 : i32
    %c0_i32_0 = arith.constant 0 : i32
    %c0_i32_1 = arith.constant 0 : i32
    return %c0_i32, %c0_i32_0 : i32, i32
  }
  func.func @transform_7(%arg0: i32) -> (i32, i32) {
    %c0_i32 = arith.constant 0 : i32
    %c0_i32_0 = arith.constant 0 : i32
    %c0_i32_1 = arith.constant 0 : i32
    return %c0_i32, %c0_i32_0 : i32, i32
  }
  func.func @transform_8(%arg0: i32) -> (i32, i32) {
    %c0_i32 = arith.constant 0 : i32
    %c0_i32_0 = arith.constant 0 : i32
    %c0_i32_1 = arith.constant 0 : i32
    return %c0_i32, %c0_i32_0 : i32, i32
  }
  func.func @transform_9(%arg0: i32) -> (i32, i32) {
    %c0_i32 = arith.constant 0 : i32
    %c0_i32_0 = arith.constant 0 : i32
    return %c0_i32, %arg0 : i32, i32
  }
}

</mosaic_0001>

<llo_original>
// kernel: tpu_custom_call.1
$region0: #{tpu_custom_call.1}
  #allocation0 [shape = 'u32[]', space=smem, size = 0x4, offset = 0x4, fixed_abs, tag = 'smem constant byte address 0x4 - core index']
  #allocation1 [shape = 'u32[144,128]{1,0:T(1,128)}', space=vmem, size = 0x12000, scoped, tag = 'internal scratch']
  #allocation2 [shape = 'f32[1,1]{1,0:T(1,128)S(1)}', space=vmem, size = 0x200, scoped, tag = 'scoped memory for tpu_custom_call.1']
  %s0 = inlined_call_operand.vmem [shape: f32[512,32], index: 0, kind: input, shape index: {}]
  %s1 = inlined_call_operand.vmem [shape: bf16[32,128], index: 1, kind: input, shape index: {}]
  %s2 = inlined_call_operand.vmem [shape: f32[1,128], index: 2, kind: input, shape index: {}]
  %s3 = inlined_call_operand.vmem [shape: bf16[128,128], index: 3, kind: input, shape index: {}]
  %s4 = inlined_call_operand.vmem [shape: f32[1,128], index: 4, kind: input, shape index: {}]
  %s5 = inlined_call_operand.vmem [shape: bf16[128,128], index: 5, kind: input, shape index: {}]
  %s6 = inlined_call_operand.vmem [shape: f32[1,128], index: 6, kind: input, shape index: {}]
  %s7 = inlined_call_operand.vmem [shape: f32[1,128], index: 7, kind: input, shape index: {}]
  %s8 = inlined_call_operand.<no memory space> [shape: f32[1,1], index: 8, kind: input, shape index: {}]
  %s9 = inlined_call_operand.hbm [shape: f32[1,512], index: 9, kind: output, shape index: {}]
  %s10 = sld [smem:[#allocation0]]
  $region46: #{tpu_custom_call.1} parent=0
    _
  %s12 = ssub.s32 1, %s10
  %s13 = scalar_select 0, %s12, %s10
  %v14 = vstv %s8
  %15 = vst [vmem:[#allocation2] sm:$0x1] %v14
  $region1: #{tpu_custom_call.1} parent=0
    #allocation3 [shape = 'u8[2048]{0}', space=vmem, size = 0x800, scoped, tag = 'output window, operand 0, single buffered']
    #allocation4 [shape = 's32[1]{0}', space=sflag, size = 0x4, scoped, tag = 'scoped memory for tpu_custom_call.1']
    %16 = vsyncpa [#allocation4], 0
    // Predicated region
    $region2: #{tpu_custom_call.1} parent=1 // pred_check
      _
    $region3: #{tpu_custom_call.1} parent=1 // pred_check_branch
      %18 = sbr.rel (0) target = $region5
    $region4: #{tpu_custom_call.1} parent=1 // pred_region
      _
    $region5: #{tpu_custom_call.1} parent=1 // pred_fallthru
      _
    // Predicated region
    $region6: #{tpu_custom_call.1} parent=1 // pred_check
      _
    $region7: #{tpu_custom_call.1} parent=1 // pred_check_branch
      %20 = sbr.rel (0) target = $region9
    $region8: #{tpu_custom_call.1} parent=1 // pred_region
      _
    $region9: #{tpu_custom_call.1} parent=1 // pred_fallthru
      _
    // Predicated region
    $region10: #{tpu_custom_call.1} parent=1 // pred_check
      _
    $region11: #{tpu_custom_call.1} parent=1 // pred_check_branch
      %22 = sbr.rel (0) target = $region13
    $region12: #{tpu_custom_call.1} parent=1 // pred_region
      _
    $region13: #{tpu_custom_call.1} parent=1 // pred_fallthru
      _
    // Predicated region
    $region14: #{tpu_custom_call.1} parent=1 // pred_check
      _
    $region15: #{tpu_custom_call.1} parent=1 // pred_check_branch
      %24 = sbr.rel (0) target = $region17
    $region16: #{tpu_custom_call.1} parent=1 // pred_region
      _
    $region17: #{tpu_custom_call.1} parent=1 // pred_fallthru
      _
    // Predicated region
    $region18: #{tpu_custom_call.1} parent=1 // pred_check
      _
    $region19: #{tpu_custom_call.1} parent=1 // pred_check_branch
      %26 = sbr.rel (0) target = $region21
    $region20: #{tpu_custom_call.1} parent=1 // pred_region
      _
    $region21: #{tpu_custom_call.1} parent=1 // pred_fallthru
      _
    // Predicated region
    $region22: #{tpu_custom_call.1} parent=1 // pred_check
      _
    $region23: #{tpu_custom_call.1} parent=1 // pred_check_branch
      %28 = sbr.rel (0) target = $region25
    $region24: #{tpu_custom_call.1} parent=1 // pred_region
      _
    $region25: #{tpu_custom_call.1} parent=1 // pred_fallthru
      _
    // Predicated region
    $region26: #{tpu_custom_call.1} parent=1 // pred_check
      _
    $region27: #{tpu_custom_call.1} parent=1 // pred_check_branch
      %30 = sbr.rel (0) target = $region29
    $region28: #{tpu_custom_call.1} parent=1 // pred_region
      _
    $region29: #{tpu_custom_call.1} parent=1 // pred_fallthru
      _
    // Predicated region
    $region30: #{tpu_custom_call.1} parent=1 // pred_check
      _
    $region31: #{tpu_custom_call.1} parent=1 // pred_check_branch
      %32 = sbr.rel (0) target = $region33
    $region32: #{tpu_custom_call.1} parent=1 // pred_region
      _
    $region33: #{tpu_custom_call.1} parent=1 // pred_fallthru
      _
    // Predicated region
    $region34: #{tpu_custom_call.1} parent=1 // pred_check
      _
    $region35: #{tpu_custom_call.1} parent=1 // pred_check_branch
      %34 = sbr.rel (0) target = $region37
    $region36: #{tpu_custom_call.1} parent=1 // pred_region
      _
    $region37: #{tpu_custom_call.1} parent=1 // pred_fallthru
      _
    %v36 = vld [vmem:[%s0] sm:$0xff]
    %v37 = vld [vmem:[%s0 + $0x8] sm:$0xff]
    %v38 = vld [vmem:[%s0 + $0x10] sm:$0xff]
    %v39 = vld [vmem:[%s0 + $0x18] sm:$0xff]
    %v40 = vld [vmem:[%s0 + $0x20] sm:$0xff]
    %v41 = vld [vmem:[%s0 + $0x28] sm:$0xff]
    %v42 = vld [vmem:[%s0 + $0x30] sm:$0xff]
    %v43 = vld [vmem:[%s0 + $0x38] sm:$0xff]
    %v44 = vld [vmem:[%s0 + $0x40] sm:$0xff]
    %v45 = vld [vmem:[%s0 + $0x48] sm:$0xff]
    %v46 = vld [vmem:[%s0 + $0x50] sm:$0xff]
    %v47 = vld [vmem:[%s0 + $0x58] sm:$0xff]
    %v48 = vld [vmem:[%s0 + $0x60] sm:$0xff]
    %v49 = vld [vmem:[%s0 + $0x68] sm:$0xff]
    %v50 = vld [vmem:[%s0 + $0x70] sm:$0xff]
    %v51 = vld [vmem:[%s0 + $0x78] sm:$0xff]
    %v52 = vld [vmem:[%s0 + $0x80] sm:$0xff]
    %v53 = vld [vmem:[%s0 + $0x88] sm:$0xff]
    %v54 = vld [vmem:[%s0 + $0x90] sm:$0xff]
    %v55 = vld [vmem:[%s0 + $0x98] sm:$0xff]
    %v56 = vld [vmem:[%s0 + $0xa0] sm:$0xff]
    %v57 = vld [vmem:[%s0 + $0xa8] sm:$0xff]
    %v58 = vld [vmem:[%s0 + $0xb0] sm:$0xff]
    %v59 = vld [vmem:[%s0 + $0xb8] sm:$0xff]
    %v60 = vld [vmem:[%s0 + $0xc0] sm:$0xff]
    %v61 = vld [vmem:[%s0 + $0xc8] sm:$0xff]
    %v62 = vld [vmem:[%s0 + $0xd0] sm:$0xff]
    %v63 = vld [vmem:[%s0 + $0xd8] sm:$0xff]
    %v64 = vld [vmem:[%s0 + $0xe0] sm:$0xff]
    %v65 = vld [vmem:[%s0 + $0xe8] sm:$0xff]
    %v66 = vld [vmem:[%s0 + $0xf0] sm:$0xff]
    %v67 = vld [vmem:[%s0 + $0xf8] sm:$0xff]
    %v68 = vld [vmem:[%s0 + $0x100] sm:$0xff]
    %v69 = vld [vmem:[%s0 + $0x108] sm:$0xff]
    %v70 = vld [vmem:[%s0 + $0x110] sm:$0xff]
    %v71 = vld [vmem:[%s0 + $0x118] sm:$0xff]
    %v72 = vld [vmem:[%s0 + $0x120] sm:$0xff]
    %v73 = vld [vmem:[%s0 + $0x128] sm:$0xff]
    %v74 = vld [vmem:[%s0 + $0x130] sm:$0xff]
    %v75 = vld [vmem:[%s0 + $0x138] sm:$0xff]
    %v76 = vld [vmem:[%s0 + $0x140] sm:$0xff]
    %v77 = vld [vmem:[%s0 + $0x148] sm:$0xff]
    %v78 = vld [vmem:[%s0 + $0x150] sm:$0xff]
    %v79 = vld [vmem:[%s0 + $0x158] sm:$0xff]
    %v80 = vld [vmem:[%s0 + $0x160] sm:$0xff]
    %v81 = vld [vmem:[%s0 + $0x168] sm:$0xff]
    %v82 = vld [vmem:[%s0 + $0x170] sm:$0xff]
    %v83 = vld [vmem:[%s0 + $0x178] sm:$0xff]
    %v84 = vld [vmem:[%s0 + $0x180] sm:$0xff]
    %v85 = vld [vmem:[%s0 + $0x188] sm:$0xff]
    %v86 = vld [vmem:[%s0 + $0x190] sm:$0xff]
    %v87 = vld [vmem:[%s0 + $0x198] sm:$0xff]
    %v88 = vld [vmem:[%s0 + $0x1a0] sm:$0xff]
    %v89 = vld [vmem:[%s0 + $0x1a8] sm:$0xff]
    %v90 = vld [vmem:[%s0 + $0x1b0] sm:$0xff]
    %v91 = vld [vmem:[%s0 + $0x1b8] sm:$0xff]
    %v92 = vld [vmem:[%s0 + $0x1c0] sm:$0xff]
    %v93 = vld [vmem:[%s0 + $0x1c8] sm:$0xff]
    %v94 = vld [vmem:[%s0 + $0x1d0] sm:$0xff]
    %v95 = vld [vmem:[%s0 + $0x1d8] sm:$0xff]
    %v96 = vld [vmem:[%s0 + $0x1e0] sm:$0xff]
    %v97 = vld [vmem:[%s0 + $0x1e8] sm:$0xff]
    %v98 = vld [vmem:[%s0 + $0x1f0] sm:$0xff]
    %v99 = vld [vmem:[%s0 + $0x1f8] sm:$0xff]
    %v100 = vpack.c.bf16 %v37, %v36
    %v101 = vpack.c.bf16 %v39, %v38
    %v102 = vpack.c.bf16 %v41, %v40
    %v103 = vpack.c.bf16 %v43, %v42
    %v104 = vpack.c.bf16 %v45, %v44
    %v105 = vpack.c.bf16 %v47, %v46
    %v106 = vpack.c.bf16 %v49, %v48
    %v107 = vpack.c.bf16 %v51, %v50
    %v108 = vpack.c.bf16 %v53, %v52
    %v109 = vpack.c.bf16 %v55, %v54
    %v110 = vpack.c.bf16 %v57, %v56
    %v111 = vpack.c.bf16 %v59, %v58
    %v112 = vpack.c.bf16 %v61, %v60
    %v113 = vpack.c.bf16 %v63, %v62
    %v114 = vpack.c.bf16 %v65, %v64
    %v115 = vpack.c.bf16 %v67, %v66
    %v116 = vpack.c.bf16 %v69, %v68
    %v117 = vpack.c.bf16 %v71, %v70
    %v118 = vpack.c.bf16 %v73, %v72
    %v119 = vpack.c.bf16 %v75, %v74
    %v120 = vpack.c.bf16 %v77, %v76
    %v121 = vpack.c.bf16 %v79, %v78
    %v122 = vpack.c.bf16 %v81, %v80
    %v123 = vpack.c.bf16 %v83, %v82
    %v124 = vpack.c.bf16 %v85, %v84
    %v125 = vpack.c.bf16 %v87, %v86
    %v126 = vpack.c.bf16 %v89, %v88
    %v127 = vpack.c.bf16 %v91, %v90
    %v128 = vpack.c.bf16 %v93, %v92
    %v129 = vpack.c.bf16 %v95, %v94
    %v130 = vpack.c.bf16 %v97, %v96
    %v131 = vpack.c.bf16 %v99, %v98
    %v132 = vld [vmem:[%s1] sm:$0xf]
    %v133 = vld [vmem:[%s1 + $0x4] sm:$0xf]
    %v134 = vld [vmem:[%s1 + $0x8] sm:$0xf]
    %v135 = vld [vmem:[%s1 + $0xc] sm:$0xf]
    %v136 = vld [vmem:[%s2] sm:$0x1]
    %v138 = vlaneseq
    %v139 = vshrl.u32 %v138, 7
    %v140 = vsub.s32 0, %v139
    %v141 = vrot.slane %v136, %v140
    %v147 = vunpack.c.l.b16 %v132
    %v148 = vunpack.c.l.b16 %v133
    %v149 = vunpack.c.l.b16 %v134
    %v150 = vunpack.c.l.b16 %v135
    %v151 = vpack.c.b16 %v148, %v147
    %v152 = vpack.c.b16 %v150, %v149
    %vm155 = vcmask 261120
    %v157 = vsel %vm155, %v100, 0
    %v160 = vsel %vm155, %v101, 0
    %v163 = vsel %vm155, %v102, 0
    %v166 = vsel %vm155, %v103, 0
    %v169 = vsel %vm155, %v104, 0
    %v172 = vsel %vm155, %v105, 0
    %v175 = vsel %vm155, %v106, 0
    %v178 = vsel %vm155, %v107, 0
    %v181 = vsel %vm155, %v108, 0
    %v184 = vsel %vm155, %v109, 0
    %v187 = vsel %vm155, %v110, 0
    %v190 = vsel %vm155, %v111, 0
    %v193 = vsel %vm155, %v112, 0
    %v196 = vsel %vm155, %v113, 0
    %v199 = vsel %vm155, %v114, 0
    %v202 = vsel %vm155, %v115, 0
    %v205 = vsel %vm155, %v116, 0
    %v208 = vsel %vm155, %v117, 0
    %v211 = vsel %vm155, %v118, 0
    %v214 = vsel %vm155, %v119, 0
    %v217 = vsel %vm155, %v120, 0
    %v220 = vsel %vm155, %v121, 0
    %v223 = vsel %vm155, %v122, 0
    %v226 = vsel %vm155, %v123, 0
    %v229 = vsel %vm155, %v124, 0
    %v232 = vsel %vm155, %v125, 0
    %v235 = vsel %vm155, %v126, 0
    %v238 = vsel %vm155, %v127, 0
    %v241 = vsel %vm155, %v128, 0
    %v244 = vsel %vm155, %v129, 0
    %v247 = vsel %vm155, %v130, 0
    %v250 = vsel %vm155, %v131, 0
    %252 = vmatprep.subr.bf16.mxu0 0
    %253 = vmatpush1.bf16.msra.mxu0 %v151
    %254 = vmatprep.subr.bf16.mxu0 0
    %255 = vmatpush1.bf16.msra.mxu0 %v152
    %256 = vmatprep.subr.bf16.mxu0 0
    %257 = vmatpush1.bf16.msra.mxu0 0
    %258 = vmatprep.subr.bf16.mxu0 0
    %259 = vmatpush1.bf16.msra.mxu0 0
    %260 = vmatprep.subr.bf16.mxu0 0
    %261 = vmatpush1.bf16.msra.mxu0 0
    %262 = vmatprep.subr.bf16.mxu0 0
    %263 = vmatpush1.bf16.msra.mxu0 0
    %264 = vmatprep.subr.bf16.mxu0 0
    %265 = vmatpush1.bf16.msra.mxu0 0
    %266 = vmatprep.subr.bf16.mxu0 0
    %267 = vmatpush1.bf16.msra.mxu0 0
    %268 = vmatprep.subr.bf16.mxu0 0
    %269 = vmatpush1.bf16.msra.mxu0 0
    %270 = vmatprep.subr.bf16.mxu0 0
    %271 = vmatpush1.bf16.msra.mxu0 0
    %272 = vmatprep.subr.bf16.mxu0 0
    %273 = vmatpush1.bf16.msra.mxu0 0
    %274 = vmatprep.subr.bf16.mxu0 0
    %275 = vmatpush1.bf16.msra.mxu0 0
    %276 = vmatprep.subr.bf16.mxu0 0
    %277 = vmatpush1.bf16.msra.mxu0 0
    %278 = vmatprep.subr.bf16.mxu0 0
    %279 = vmatpush1.bf16.msra.mxu0 0
    %280 = vmatprep.subr.bf16.mxu0 0
    %281 = vmatpush1.bf16.msra.mxu0 0
    %282 = vmatprep.subr.bf16.mxu0 0
    %283 = vmatpush1.bf16.msra.mxu0 0
    %284 = vmatprep.mubr.bf16.mxu0 0
    %285 = vmatmul.mubr.bf16.gmra.mrb[0].mxu0 %v157
    %v286 = vpop.f32.mrb[0].mxu0
    %v287 = vadd.f32 %v141, %v286
    %v288 = vpop.f32.mrb[0].mxu0
    %v289 = vpop.f32.mrb[0].mxu0
    %v290 = vadd.f32 %v141, %v289
    %v291 = vpop.f32.mrb[0].mxu0
    %292 = vmatprep.mubr.bf16.mxu0 0
    %293 = vmatmul.mubr.bf16.gmra.mrb[0].mxu0 %v160
    %v294 = vpop.f32.mrb[0].mxu0
    %v295 = vadd.f32 %v141, %v294
    %v296 = vpop.f32.mrb[0].mxu0
    %v297 = vpop.f32.mrb[0].mxu0
    %v298 = vadd.f32 %v141, %v297
    %v299 = vpop.f32.mrb[0].mxu0
    %300 = vmatprep.mubr.bf16.mxu0 0
    %301 = vmatmul.mubr.bf16.gmra.mrb[0].mxu0 %v163
    %v302 = vpop.f32.mrb[0].mxu0
    %v303 = vadd.f32 %v141, %v302
    %v304 = vpop.f32.mrb[0].mxu0
    %v305 = vpop.f32.mrb[0].mxu0
    %v306 = vadd.f32 %v141, %v305
    %v307 = vpop.f32.mrb[0].mxu0
    %308 = vmatprep.mubr.bf16.mxu0 0
    %309 = vmatmul.mubr.bf16.gmra.mrb[0].mxu0 %v166
    %v310 = vpop.f32.mrb[0].mxu0
    %v311 = vadd.f32 %v141, %v310
    %v312 = vpop.f32.mrb[0].mxu0
    %v313 = vpop.f32.mrb[0].mxu0
    %v314 = vadd.f32 %v141, %v313
    %v315 = vpop.f32.mrb[0].mxu0
    %316 = vmatprep.mubr.bf16.mxu0 0
    %317 = vmatmul.mubr.bf16.gmra.mrb[0].mxu0 %v169
    %v318 = vpop.f32.mrb[0].mxu0
    %v319 = vadd.f32 %v141, %v318
    %v320 = vpop.f32.mrb[0].mxu0
    %v321 = vpop.f32.mrb[0].mxu0
    %v322 = vadd.f32 %v141, %v321
    %v323 = vpop.f32.mrb[0].mxu0
    %324 = vmatprep.mubr.bf16.mxu0 0
    %325 = vmatmul.mubr.bf16.gmra.mrb[0].mxu0 %v172
    %v326 = vpop.f32.mrb[0].mxu0
    %v327 = vadd.f32 %v141, %v326
    %v328 = vpop.f32.mrb[0].mxu0
    %v329 = vpop.f32.mrb[0].mxu0
    %v330 = vadd.f32 %v141, %v329
    %v331 = vpop.f32.mrb[0].mxu0
    %332 = vmatprep.mubr.bf16.mxu0 0
    %333 = vmatmul.mubr.bf16.gmra.mrb[0].mxu0 %v175
    %v334 = vpop.f32.mrb[0].mxu0
    %v335 = vadd.f32 %v141, %v334
    %v336 = vpop.f32.mrb[0].mxu0
    %v337 = vpop.f32.mrb[0].mxu0
    %v338 = vadd.f32 %v141, %v337
    %v339 = vpop.f32.mrb[0].mxu0
    %340 = vmatprep.mubr.bf16.mxu0 0
    %341 = vmatmul.mubr.bf16.gmra.mrb[0].mxu0 %v178
    %v342 = vpop.f32.mrb[0].mxu0
    %v343 = vadd.f32 %v141, %v342
    %v344 = vpop.f32.mrb[0].mxu0
    %v345 = vpop.f32.mrb[0].mxu0
    %v346 = vadd.f32 %v141, %v345
    %v347 = vpop.f32.mrb[0].mxu0
    %348 = vmatprep.mubr.bf16.mxu0 0
    %349 = vmatmul.mubr.bf16.gmra.mrb[0].mxu0 %v181
    %v350 = vpop.f32.mrb[0].mxu0
    %v351 = vadd.f32 %v141, %v350
    %v352 = vpop.f32.mrb[0].mxu0
    %v353 = vpop.f32.mrb[0].mxu0
    %v354 = vadd.f32 %v141, %v353
    %v355 = vpop.f32.mrb[0].mxu0
    %356 = vmatprep.mubr.bf16.mxu0 0
    %357 = vmatmul.mubr.bf16.gmra.mrb[0].mxu0 %v184
    %v358 = vpop.f32.mrb[0].mxu0
    %v359 = vadd.f32 %v141, %v358
    %v360 = vpop.f32.mrb[0].mxu0
    %v361 = vpop.f32.mrb[0].mxu0
    %v362 = vadd.f32 %v141, %v361
    %v363 = vpop.f32.mrb[0].mxu0
    %364 = vmatprep.mubr.bf16.mxu0 0
    %365 = vmatmul.mubr.bf16.gmra.mrb[0].mxu0 %v187
    %v366 = vpop.f32.mrb[0].mxu0
    %v367 = vadd.f32 %v141, %v366
    %v368 = vpop.f32.mrb[0].mxu0
    %v369 = vpop.f32.mrb[0].mxu0
    %v370 = vadd.f32 %v141, %v369
    %v371 = vpop.f32.mrb[0].mxu0
    %372 = vmatprep.mubr.bf16.mxu0 0
    %373 = vmatmul.mubr.bf16.gmra.mrb[0].mxu0 %v190
    %v374 = vpop.f32.mrb[0].mxu0
    %v375 = vadd.f32 %v141, %v374
    %v376 = vpop.f32.mrb[0].mxu0
    %v377 = vpop.f32.mrb[0].mxu0
    %v378 = vadd.f32 %v141, %v377
    %v379 = vpop.f32.mrb[0].mxu0
    %380 = vmatprep.mubr.bf16.mxu0 0
    %381 = vmatmul.mubr.bf16.gmra.mrb[0].mxu0 %v193
    %v382 = vpop.f32.mrb[0].mxu0
    %v383 = vadd.f32 %v141, %v382
    %v384 = vpop.f32.mrb[0].mxu0
    %v385 = vpop.f32.mrb[0].mxu0
    %v386 = vadd.f32 %v141, %v385
    %v387 = vpop.f32.mrb[0].mxu0
    %388 = vmatprep.mubr.bf16.mxu0 0
    %389 = vmatmul.mubr.bf16.gmra.mrb[0].mxu0 %v196
    %v390 = vpop.f32.mrb[0].mxu0
    %v391 = vadd.f32 %v141, %v390
    %v392 = vpop.f32.mrb[0].mxu0
    %v393 = vpop.f32.mrb[0].mxu0
    %v394 = vadd.f32 %v141, %v393
    %v395 = vpop.f32.mrb[0].mxu0
    %396 = vmatprep.mubr.bf16.mxu0 0
    %397 = vmatmul.mubr.bf16.gmra.mrb[0].mxu0 %v199
    %v398 = vpop.f32.mrb[0].mxu0
    %v399 = vadd.f32 %v141, %v398
    %v400 = vpop.f32.mrb[0].mxu0
    %v401 = vpop.f32.mrb[0].mxu0
    %v402 = vadd.f32 %v141, %v401
    %v403 = vpop.f32.mrb[0].mxu0
    %404 = vmatprep.mubr.bf16.mxu0 0
    %405 = vmatmul.mubr.bf16.gmra.mrb[0].mxu0 %v202
    %v406 = vpop.f32.mrb[0].mxu0
    %v407 = vadd.f32 %v141, %v406
    %v408 = vpop.f32.mrb[0].mxu0
    %v409 = vpop.f32.mrb[0].mxu0
    %v410 = vadd.f32 %v141, %v409
    %v411 = vpop.f32.mrb[0].mxu0
    %412 = vmatprep.mubr.bf16.mxu0 0
    %413 = vmatmul.mubr.bf16.gmra.mrb[0].mxu0 %v205
    %v414 = vpop.f32.mrb[0].mxu0
    %v415 = vadd.f32 %v141, %v414
    %v416 = vpop.f32.mrb[0].mxu0
    %v417 = vpop.f32.mrb[0].mxu0
    %v418 = vadd.f32 %v141, %v417
    %v419 = vpop.f32.mrb[0].mxu0
    %420 = vmatprep.mubr.bf16.mxu0 0
    %421 = vmatmul.mubr.bf16.gmra.mrb[0].mxu0 %v208
    %v422 = vpop.f32.mrb[0].mxu0
    %v423 = vadd.f32 %v141, %v422
    %v424 = vpop.f32.mrb[0].mxu0
    %v425 = vpop.f32.mrb[0].mxu0
    %v426 = vadd.f32 %v141, %v425
    %v427 = vpop.f32.mrb[0].mxu0
    %428 = vmatprep.mubr.bf16.mxu0 0
    %429 = vmatmul.mubr.bf16.gmra.mrb[0].mxu0 %v211
    %v430 = vpop.f32.mrb[0].mxu0
    %v431 = vadd.f32 %v141, %v430
    %v432 = vpop.f32.mrb[0].mxu0
    %v433 = vpop.f32.mrb[0].mxu0
    %v434 = vadd.f32 %v141, %v433
    %v435 = vpop.f32.mrb[0].mxu0
    %436 = vmatprep.mubr.bf16.mxu0 0
    %437 = vmatmul.mubr.bf16.gmra.mrb[0].mxu0 %v214
    %v438 = vpop.f32.mrb[0].mxu0
    %v439 = vadd.f32 %v141, %v438
    %v440 = vpop.f32.mrb[0].mxu0
    %v441 = vpop.f32.mrb[0].mxu0
    %v442 = vadd.f32 %v141, %v441
    %v443 = vpop.f32.mrb[0].mxu0
    %444 = vmatprep.mubr.bf16.mxu0 0
    %445 = vmatmul.mubr.bf16.gmra.mrb[0].mxu0 %v217
    %v446 = vpop.f32.mrb[0].mxu0
    %v447 = vadd.f32 %v141, %v446
    %v448 = vpop.f32.mrb[0].mxu0
    %v449 = vpop.f32.mrb[0].mxu0
    %v450 = vadd.f32 %v141, %v449
    %v451 = vpop.f32.mrb[0].mxu0
    %452 = vmatprep.mubr.bf16.mxu0 0
    %453 = vmatmul.mubr.bf16.gmra.mrb[0].mxu0 %v220
    %v454 = vpop.f32.mrb[0].mxu0
    %v455 = vadd.f32 %v141, %v454
    %v456 = vpop.f32.mrb[0].mxu0
    %v457 = vpop.f32.mrb[0].mxu0
    %v458 = vadd.f32 %v141, %v457
    %v459 = vpop.f32.mrb[0].mxu0
    %460 = vmatprep.mubr.bf16.mxu0 0
    %461 = vmatmul.mubr.bf16.gmra.mrb[0].mxu0 %v223
    %v462 = vpop.f32.mrb[0].mxu0
    %v463 = vadd.f32 %v141, %v462
    %v464 = vpop.f32.mrb[0].mxu0
    %v465 = vpop.f32.mrb[0].mxu0
    %v466 = vadd.f32 %v141, %v465
    %v467 = vpop.f32.mrb[0].mxu0
    %468 = vmatprep.mubr.bf16.mxu0 0
    %469 = vmatmul.mubr.bf16.gmra.mrb[0].mxu0 %v226
    %v470 = vpop.f32.mrb[0].mxu0
    %v471 = vadd.f32 %v141, %v470
    %v472 = vpop.f32.mrb[0].mxu0
    %v473 = vpop.f32.mrb[0].mxu0
    %v474 = vadd.f32 %v141, %v473
    %v475 = vpop.f32.mrb[0].mxu0
    %476 = vmatprep.mubr.bf16.mxu0 0
    %477 = vmatmul.mubr.bf16.gmra.mrb[0].mxu0 %v229
    %v478 = vpop.f32.mrb[0].mxu0
    %v479 = vadd.f32 %v141, %v478
    %v480 = vpop.f32.mrb[0].mxu0
    %v481 = vpop.f32.mrb[0].mxu0
    %v482 = vadd.f32 %v141, %v481
    %v483 = vpop.f32.mrb[0].mxu0
    %484 = vmatprep.mubr.bf16.mxu0 0
    %485 = vmatmul.mubr.bf16.gmra.mrb[0].mxu0 %v232
    %v486 = vpop.f32.mrb[0].mxu0
    %v487 = vadd.f32 %v141, %v486
    %v488 = vpop.f32.mrb[0].mxu0
    %v489 = vpop.f32.mrb[0].mxu0
    %v490 = vadd.f32 %v141, %v489
    %v491 = vpop.f32.mrb[0].mxu0
    %492 = vmatprep.mubr.bf16.mxu0 0
    %493 = vmatmul.mubr.bf16.gmra.mrb[0].mxu0 %v235
    %v494 = vpop.f32.mrb[0].mxu0
    %v495 = vadd.f32 %v141, %v494
    %v496 = vpop.f32.mrb[0].mxu0
    %v497 = vpop.f32.mrb[0].mxu0
    %v498 = vadd.f32 %v141, %v497
    %v499 = vpop.f32.mrb[0].mxu0
    %500 = vmatprep.mubr.bf16.mxu0 0
    %501 = vmatmul.mubr.bf16.gmra.mrb[0].mxu0 %v238
    %v502 = vpop.f32.mrb[0].mxu0
    %v503 = vadd.f32 %v141, %v502
    %v504 = vpop.f32.mrb[0].mxu0
    %v505 = vpop.f32.mrb[0].mxu0
    %v506 = vadd.f32 %v141, %v505
    %v507 = vpop.f32.mrb[0].mxu0
    %508 = vmatprep.mubr.bf16.mxu0 0
    %509 = vmatmul.mubr.bf16.gmra.mrb[0].mxu0 %v241
    %v510 = vpop.f32.mrb[0].mxu0
    %v511 = vadd.f32 %v141, %v510
    %v512 = vpop.f32.mrb[0].mxu0
    %v513 = vpop.f32.mrb[0].mxu0
    %v514 = vadd.f32 %v141, %v513
    %v515 = vpop.f32.mrb[0].mxu0
    %516 = vmatprep.mubr.bf16.mxu0 0
    %517 = vmatmul.mubr.bf16.gmra.mrb[0].mxu0 %v244
    %v518 = vpop.f32.mrb[0].mxu0
    %v519 = vadd.f32 %v141, %v518
    %v520 = vpop.f32.mrb[0].mxu0
    %v521 = vpop.f32.mrb[0].mxu0
    %v522 = vadd.f32 %v141, %v521
    %v523 = vpop.f32.mrb[0].mxu0
    %524 = vmatprep.mubr.bf16.mxu0 0
    %525 = vmatmul.mubr.bf16.gmra.mrb[0].mxu0 %v247
    %v526 = vpop.f32.mrb[0].mxu0
    %v527 = vadd.f32 %v141, %v526
    %v528 = vpop.f32.mrb[0].mxu0
    %v529 = vpop.f32.mrb[0].mxu0
    %v530 = vadd.f32 %v141, %v529
    %v531 = vpop.f32.mrb[0].mxu0
    %532 = vmatprep.mubr.bf16.mxu0 0
    %533 = vmatmul.mubr.bf16.gmra.mrb[0].mxu0 %v250
    %v534 = vpop.f32.mrb[0].mxu0
    %v535 = vadd.f32 %v141, %v534
    %v536 = vpop.f32.mrb[0].mxu0
    %v537 = vpop.f32.mrb[0].mxu0
    %v538 = vadd.f32 %v141, %v537
    %v539 = vpop.f32.mrb[0].mxu0
    %540 = vdwg.mxu0
    %vm541 = vcmp.gt.f32.partialorder %v287, 0.0
    %vm542 = vcmp.gt.f32.partialorder %v290, 0.0
    %vm543 = vcmp.gt.f32.partialorder %v295, 0.0
    %vm544 = vcmp.gt.f32.partialorder %v298, 0.0
    %vm545 = vcmp.gt.f32.partialorder %v303, 0.0
    %vm546 = vcmp.gt.f32.partialorder %v306, 0.0
    %vm547 = vcmp.gt.f32.partialorder %v311, 0.0
    %vm548 = vcmp.gt.f32.partialorder %v314, 0.0
    %vm549 = vcmp.gt.f32.partialorder %v319, 0.0
    %vm550 = vcmp.gt.f32.partialorder %v322, 0.0
    %vm551 = vcmp.gt.f32.partialorder %v327, 0.0
    %vm552 = vcmp.gt.f32.partialorder %v330, 0.0
    %vm553 = vcmp.gt.f32.partialorder %v335, 0.0
    %vm554 = vcmp.gt.f32.partialorder %v338, 0.0
    %vm555 = vcmp.gt.f32.partialorder %v343, 0.0
    %vm556 = vcmp.gt.f32.partialorder %v346, 0.0
    %vm557 = vcmp.gt.f32.partialorder %v351, 0.0
    %vm558 = vcmp.gt.f32.partialorder %v354, 0.0
    %vm559 = vcmp.gt.f32.partialorder %v359, 0.0
    %vm560 = vcmp.gt.f32.partialorder %v362, 0.0
    %vm561 = vcmp.gt.f32.partialorder %v367, 0.0
    %vm562 = vcmp.gt.f32.partialorder %v370, 0.0
    %vm563 = vcmp.gt.f32.partialorder %v375, 0.0
    %vm564 = vcmp.gt.f32.partialorder %v378, 0.0
    %vm565 = vcmp.gt.f32.partialorder %v383, 0.0
    %vm566 = vcmp.gt.f32.partialorder %v386, 0.0
    %vm567 = vcmp.gt.f32.partialorder %v391, 0.0
    %vm568 = vcmp.gt.f32.partialorder %v394, 0.0
    %vm569 = vcmp.gt.f32.partialorder %v399, 0.0
    %vm570 = vcmp.gt.f32.partialorder %v402, 0.0
    %vm571 = vcmp.gt.f32.partialorder %v407, 0.0
    %vm572 = vcmp.gt.f32.partialorder %v410, 0.0
    %vm573 = vcmp.gt.f32.partialorder %v415, 0.0
    %vm574 = vcmp.gt.f32.partialorder %v418, 0.0
    %vm575 = vcmp.gt.f32.partialorder %v423, 0.0
    %vm576 = vcmp.gt.f32.partialorder %v426, 0.0
    %vm577 = vcmp.gt.f32.partialorder %v431, 0.0
    %vm578 = vcmp.gt.f32.partialorder %v434, 0.0
    %vm579 = vcmp.gt.f32.partialorder %v439, 0.0
    %vm580 = vcmp.gt.f32.partialorder %v442, 0.0
    %vm581 = vcmp.gt.f32.partialorder %v447, 0.0
    %vm582 = vcmp.gt.f32.partialorder %v450, 0.0
    %vm583 = vcmp.gt.f32.partialorder %v455, 0.0
    %vm584 = vcmp.gt.f32.partialorder %v458, 0.0
    %vm585 = vcmp.gt.f32.partialorder %v463, 0.0
    %vm586 = vcmp.gt.f32.partialorder %v466, 0.0
    %vm587 = vcmp.gt.f32.partialorder %v471, 0.0
    %vm588 = vcmp.gt.f32.partialorder %v474, 0.0
    %vm589 = vcmp.gt.f32.partialorder %v479, 0.0
    %vm590 = vcmp.gt.f32.partialorder %v482, 0.0
    %vm591 = vcmp.gt.f32.partialorder %v487, 0.0
    %vm592 = vcmp.gt.f32.partialorder %v490, 0.0
    %vm593 = vcmp.gt.f32.partialorder %v495, 0.0
    %vm594 = vcmp.gt.f32.partialorder %v498, 0.0
    %vm595 = vcmp.gt.f32.partialorder %v503, 0.0
    %vm596 = vcmp.gt.f32.partialorder %v506, 0.0
    %vm597 = vcmp.gt.f32.partialorder %v511, 0.0
    %vm598 = vcmp.gt.f32.partialorder %v514, 0.0
    %vm599 = vcmp.gt.f32.partialorder %v519, 0.0
    %vm600 = vcmp.gt.f32.partialorder %v522, 0.0
    %vm601 = vcmp.gt.f32.partialorder %v527, 0.0
    %vm602 = vcmp.gt.f32.partialorder %v530, 0.0
    %vm603 = vcmp.gt.f32.partialorder %v535, 0.0
    %vm604 = vcmp.gt.f32.partialorder %v538, 0.0
    %v605 = vmul.f32 %v287, 0.01
    %v606 = vmul.f32 %v290, 0.01
    %v607 = vmul.f32 %v295, 0.01
    %v608 = vmul.f32 %v298, 0.01
    %v609 = vmul.f32 %v303, 0.01
    %v610 = vmul.f32 %v306, 0.01
    %v611 = vmul.f32 %v311, 0.01
    %v612 = vmul.f32 %v314, 0.01
    %v613 = vmul.f32 %v319, 0.01
    %v614 = vmul.f32 %v322, 0.01
    %v615 = vmul.f32 %v327, 0.01
    %v616 = vmul.f32 %v330, 0.01
    %v617 = vmul.f32 %v335, 0.01
    %v618 = vmul.f32 %v338, 0.01
    %v619 = vmul.f32 %v343, 0.01
    %v620 = vmul.f32 %v346, 0.01
    %v621 = vmul.f32 %v351, 0.01
    %v622 = vmul.f32 %v354, 0.01
    %v623 = vmul.f32 %v359, 0.01
    %v624 = vmul.f32 %v362, 0.01
    %v625 = vmul.f32 %v367, 0.01
    %v626 = vmul.f32 %v370, 0.01
    %v627 = vmul.f32 %v375, 0.01
    %v628 = vmul.f32 %v378, 0.01
    %v629 = vmul.f32 %v383, 0.01
    %v630 = vmul.f32 %v386, 0.01
    %v631 = vmul.f32 %v391, 0.01
    %v632 = vmul.f32 %v394, 0.01
    %v633 = vmul.f32 %v399, 0.01
    %v634 = vmul.f32 %v402, 0.01
    %v635 = vmul.f32 %v407, 0.01
    %v636 = vmul.f32 %v410, 0.01
    %v637 = vmul.f32 %v415, 0.01
    %v638 = vmul.f32 %v418, 0.01
    %v639 = vmul.f32 %v423, 0.01
    %v640 = vmul.f32 %v426, 0.01
    %v641 = vmul.f32 %v431, 0.01
    %v642 = vmul.f32 %v434, 0.01
    %v643 = vmul.f32 %v439, 0.01
    %v644 = vmul.f32 %v442, 0.01
    %v645 = vmul.f32 %v447, 0.01
    %v646 = vmul.f32 %v450, 0.01
    %v647 = vmul.f32 %v455, 0.01
    %v648 = vmul.f32 %v458, 0.01
    %v649 = vmul.f32 %v463, 0.01
    %v650 = vmul.f32 %v466, 0.01
    %v651 = vmul.f32 %v471, 0.01
    %v652 = vmul.f32 %v474, 0.01
    %v653 = vmul.f32 %v479, 0.01
    %v654 = vmul.f32 %v482, 0.01
    %v655 = vmul.f32 %v487, 0.01
    %v656 = vmul.f32 %v490, 0.01
    %v657 = vmul.f32 %v495, 0.01
    %v658 = vmul.f32 %v498, 0.01
    %v659 = vmul.f32 %v503, 0.01
    %v660 = vmul.f32 %v506, 0.01
    %v661 = vmul.f32 %v511, 0.01
    %v662 = vmul.f32 %v514, 0.01
    %v663 = vmul.f32 %v519, 0.01
    %v664 = vmul.f32 %v522, 0.01
    %v665 = vmul.f32 %v527, 0.01
    %v666 = vmul.f32 %v530, 0.01
    %v667 = vmul.f32 %v535, 0.01
    %v668 = vmul.f32 %v538, 0.01
    %v669 = vsel %vm541, %v287, %v605
    %v670 = vsel %vm542, %v290, %v606
    %v671 = vsel %vm543, %v295, %v607
    %v672 = vsel %vm544, %v298, %v608
    %v673 = vsel %vm545, %v303, %v609
    %v674 = vsel %vm546, %v306, %v610
    %v675 = vsel %vm547, %v311, %v611
    %v676 = vsel %vm548, %v314, %v612
    %v677 = vsel %vm549, %v319, %v613
    %v678 = vsel %vm550, %v322, %v614
    %v679 = vsel %vm551, %v327, %v615
    %v680 = vsel %vm552, %v330, %v616
    %v681 = vsel %vm553, %v335, %v617
    %v682 = vsel %vm554, %v338, %v618
    %v683 = vsel %vm555, %v343, %v619
    %v684 = vsel %vm556, %v346, %v620
    %v685 = vsel %vm557, %v351, %v621
    %v686 = vsel %vm558, %v354, %v622
    %v687 = vsel %vm559, %v359, %v623
    %v688 = vsel %vm560, %v362, %v624
    %v689 = vsel %vm561, %v367, %v625
    %v690 = vsel %vm562, %v370, %v626
    %v691 = vsel %vm563, %v375, %v627
    %v692 = vsel %vm564, %v378, %v628
    %v693 = vsel %vm565, %v383, %v629
    %v694 = vsel %vm566, %v386, %v630
    %v695 = vsel %vm567, %v391, %v631
    %v696 = vsel %vm568, %v394, %v632
    %v697 = vsel %vm569, %v399, %v633
    %v698 = vsel %vm570, %v402, %v634
    %v699 = vsel %vm571, %v407, %v635
    %v700 = vsel %vm572, %v410, %v636
    %v701 = vsel %vm573, %v415, %v637
    %v702 = vsel %vm574, %v418, %v638
    %v703 = vsel %vm575, %v423, %v639
    %v704 = vsel %vm576, %v426, %v640
    %v705 = vsel %vm577, %v431, %v641
    %v706 = vsel %vm578, %v434, %v642
    %v707 = vsel %vm579, %v439, %v643
    %v708 = vsel %vm580, %v442, %v644
    %v709 = vsel %vm581, %v447, %v645
    %v710 = vsel %vm582, %v450, %v646
    %v711 = vsel %vm583, %v455, %v647
    %v712 = vsel %vm584, %v458, %v648
    %v713 = vsel %vm585, %v463, %v649
    %v714 = vsel %vm586, %v466, %v650
    %v715 = vsel %vm587, %v471, %v651
    %v716 = vsel %vm588, %v474, %v652
    %v717 = vsel %vm589, %v479, %v653
    %v718 = vsel %vm590, %v482, %v654
    %v719 = vsel %vm591, %v487, %v655
    %v720 = vsel %vm592, %v490, %v656
    %v721 = vsel %vm593, %v495, %v657
    %v722 = vsel %vm594, %v498, %v658
    %v723 = vsel %vm595, %v503, %v659
    %v724 = vsel %vm596, %v506, %v660
    %v725 = vsel %vm597, %v511, %v661
    %v726 = vsel %vm598, %v514, %v662
    %v727 = vsel %vm599, %v519, %v663
    %v728 = vsel %vm600, %v522, %v664
    %v729 = vsel %vm601, %v527, %v665
    %v730 = vsel %vm602, %v530, %v666
    %v731 = vsel %vm603, %v535, %v667
    %v732 = vsel %vm604, %v538, %v668
    %v733 = vpack.c.bf16 %v670, %v669
    %v734 = vpack.c.bf16 %v672, %v671
    %v735 = vpack.c.bf16 %v674, %v673
    %v736 = vpack.c.bf16 %v676, %v675
    %v737 = vpack.c.bf16 %v678, %v677
    %v738 = vpack.c.bf16 %v680, %v679
    %v739 = vpack.c.bf16 %v682, %v681
    %v740 = vpack.c.bf16 %v684, %v683
    %v741 = vpack.c.bf16 %v686, %v685
    %v742 = vpack.c.bf16 %v688, %v687
    %v743 = vpack.c.bf16 %v690, %v689
    %v744 = vpack.c.bf16 %v692, %v691
    %v745 = vpack.c.bf16 %v694, %v693
    %v746 = vpack.c.bf16 %v696, %v695
    %v747 = vpack.c.bf16 %v698, %v697
    %v748 = vpack.c.bf16 %v700, %v699
    %v749 = vpack.c.bf16 %v702, %v701
    %v750 = vpack.c.bf16 %v704, %v703
    %v751 = vpack.c.bf16 %v706, %v705
    %v752 = vpack.c.bf16 %v708, %v707
    %v753 = vpack.c.bf16 %v710, %v709
    %v754 = vpack.c.bf16 %v712, %v711
    %v755 = vpack.c.bf16 %v714, %v713
    %v756 = vpack.c.bf16 %v716, %v715
    %v757 = vpack.c.bf16 %v718, %v717
    %v758 = vpack.c.bf16 %v720, %v719
    %v759 = vpack.c.bf16 %v722, %v721
    %v760 = vpack.c.bf16 %v724, %v723
    %v761 = vpack.c.bf16 %v726, %v725
    %v762 = vpack.c.bf16 %v728, %v727
    %v763 = vpack.c.bf16 %v730, %v729
    %v764 = vpack.c.bf16 %v732, %v731
    %v765 = vld [vmem:[%s3] sm:$0xf]
    %v766 = vld [vmem:[%s3 + $0x4] sm:$0xf]
    %v767 = vld [vmem:[%s3 + $0x8] sm:$0xf]
    %v768 = vld [vmem:[%s3 + $0xc] sm:$0xf]
    %v769 = vld [vmem:[%s3 + $0x10] sm:$0xf]
    %v770 = vld [vmem:[%s3 + $0x14] sm:$0xf]
    %v771 = vld [vmem:[%s3 + $0x18] sm:$0xf]
    %v772 = vld [vmem:[%s3 + $0x1c] sm:$0xf]
    %v773 = vld [vmem:[%s3 + $0x20] sm:$0xf]
    %v774 = vld [vmem:[%s3 + $0x24] sm:$0xf]
    %v775 = vld [vmem:[%s3 + $0x28] sm:$0xf]
    %v776 = vld [vmem:[%s3 + $0x2c] sm:$0xf]
    %v777 = vld [vmem:[%s3 + $0x30] sm:$0xf]
    %v778 = vld [vmem:[%s3 + $0x34] sm:$0xf]
    %v779 = vld [vmem:[%s3 + $0x38] sm:$0xf]
    %v780 = vld [vmem:[%s3 + $0x3c] sm:$0xf]
    %v781 = vld [vmem:[%s4] sm:$0x1]
    %v783 = vlaneseq
    %v784 = vshrl.u32 %v783, 7
    %v785 = vsub.s32 0, %v784
    %v786 = vrot.slane %v781, %v785
    %v804 = vunpack.c.l.b16 %v765
    %v805 = vunpack.c.l.b16 %v766
    %v806 = vunpack.c.l.b16 %v767
    %v807 = vunpack.c.l.b16 %v768
    %v808 = vunpack.c.l.b16 %v769
    %v809 = vunpack.c.l.b16 %v770
    %v810 = vunpack.c.l.b16 %v771
    %v811 = vunpack.c.l.b16 %v772
    %v812 = vunpack.c.l.b16 %v773
    %v813 = vunpack.c.l.b16 %v774
    %v814 = vunpack.c.l.b16 %v775
    %v815 = vunpack.c.l.b16 %v776
    %v816 = vunpack.c.l.b16 %v777
    %v817 = vunpack.c.l.b16 %v778
    %v818 = vunpack.c.l.b16 %v779
    %v819 = vunpack.c.l.b16 %v780
    %v820 = vpack.c.b16 %v805, %v804
    %v821 = vpack.c.b16 %v807, %v806
    %v822 = vpack.c.b16 %v809, %v808
    %v823 = vpack.c.b16 %v811, %v810
    %v824 = vpack.c.b16 %v813, %v812
    %v825 = vpack.c.b16 %v815, %v814
    %v826 = vpack.c.b16 %v817, %v816
    %v827 = vpack.c.b16 %v819, %v818
    %836 = vmatprep.subr.bf16.mxu0 0
    %837 = vmatpush1.bf16.msra.mxu0 %v820
    %838 = vmatprep.subr.bf16.mxu0 0
    %839 = vmatpush1.bf16.msra.mxu0 %v821
    %840 = vmatprep.subr.bf16.mxu0 0
    %841 = vmatpush1.bf16.msra.mxu0 %v822
    %842 = vmatprep.subr.bf16.mxu0 0
    %843 = vmatpush1.bf16.msra.mxu0 %v823
    %844 = vmatprep.subr.bf16.mxu0 0
    %845 = vmatpush1.bf16.msra.mxu0 %v824
    %846 = vmatprep.subr.bf16.mxu0 0
    %847 = vmatpush1.bf16.msra.mxu0 %v825
    %848 = vmatprep.subr.bf16.mxu0 0
    %849 = vmatpush1.bf16.msra.mxu0 %v826
    %850 = vmatprep.subr.bf16.mxu0 0
    %851 = vmatpush1.bf16.msra.mxu0 %v827
    %852 = vmatprep.subr.bf16.mxu0 0
    %853 = vmatpush1.bf16.msra.mxu0 0
    %854 = vmatprep.subr.bf16.mxu0 0
    %855 = vmatpush1.bf16.msra.mxu0 0
    %856 = vmatprep.subr.bf16.mxu0 0
    %857 = vmatpush1.bf16.msra.mxu0 0
    %858 = vmatprep.subr.bf16.mxu0 0
    %859 = vmatpush1.bf16.msra.mxu0 0
    %860 = vmatprep.subr.bf16.mxu0 0
    %861 = vmatpush1.bf16.msra.mxu0 0
    %862 = vmatprep.subr.bf16.mxu0 0
    %863 = vmatpush1.bf16.msra.mxu0 0
    %864 = vmatprep.subr.bf16.mxu0 0
    %865 = vmatpush1.bf16.msra.mxu0 0
    %866 = vmatprep.subr.bf16.mxu0 0
    %867 = vmatpush1.bf16.msra.mxu0 0
    %868 = vmatprep.mubr.bf16.mxu0 0
    %869 = vmatmul.mubr.bf16.gmra.mrb[0].mxu0 %v733
    %v870 = vpop.f32.mrb[0].mxu0
    %v871 = vadd.f32 %v786, %v870
    %v872 = vpop.f32.mrb[0].mxu0
    %v873 = vpop.f32.mrb[0].mxu0
    %v874 = vadd.f32 %v786, %v873
    %v875 = vpop.f32.mrb[0].mxu0
    %876 = vmatprep.mubr.bf16.mxu0 0
    %877 = vmatmul.mubr.bf16.gmra.mrb[0].mxu0 %v734
    %v878 = vpop.f32.mrb[0].mxu0
    %v879 = vadd.f32 %v786, %v878
    %v880 = vpop.f32.mrb[0].mxu0
    %v881 = vpop.f32.mrb[0].mxu0
    %v882 = vadd.f32 %v786, %v881
    %v883 = vpop.f32.mrb[0].mxu0
    %884 = vmatprep.mubr.bf16.mxu0 0
    %885 = vmatmul.mubr.bf16.gmra.mrb[0].mxu0 %v735
    %v886 = vpop.f32.mrb[0].mxu0
    %v887 = vadd.f32 %v786, %v886
    %v888 = vpop.f32.mrb[0].mxu0
    %v889 = vpop.f32.mrb[0].mxu0
    %v890 = vadd.f32 %v786, %v889
    %v891 = vpop.f32.mrb[0].mxu0
    %892 = vmatprep.mubr.bf16.mxu0 0
    %893 = vmatmul.mubr.bf16.gmra.mrb[0].mxu0 %v736
    %v894 = vpop.f32.mrb[0].mxu0
    %v895 = vadd.f32 %v786, %v894
    %v896 = vpop.f32.mrb[0].mxu0
    %v897 = vpop.f32.mrb[0].mxu0
    %v898 = vadd.f32 %v786, %v897
    %v899 = vpop.f32.mrb[0].mxu0
    %900 = vmatprep.mubr.bf16.mxu0 0
    %901 = vmatmul.mubr.bf16.gmra.mrb[0].mxu0 %v737
    %v902 = vpop.f32.mrb[0].mxu0
    %v903 = vadd.f32 %v786, %v902
    %v904 = vpop.f32.mrb[0].mxu0
    %v905 = vpop.f32.mrb[0].mxu0
    %v906 = vadd.f32 %v786, %v905
    %v907 = vpop.f32.mrb[0].mxu0
    %908 = vmatprep.mubr.bf16.mxu0 0
    %909 = vmatmul.mubr.bf16.gmra.mrb[0].mxu0 %v738
    %v910 = vpop.f32.mrb[0].mxu0
    %v911 = vadd.f32 %v786, %v910
    %v912 = vpop.f32.mrb[0].mxu0
    %v913 = vpop.f32.mrb[0].mxu0
    %v914 = vadd.f32 %v786, %v913
    %v915 = vpop.f32.mrb[0].mxu0
    %916 = vmatprep.mubr.bf16.mxu0 0
    %917 = vmatmul.mubr.bf16.gmra.mrb[0].mxu0 %v739
    %v918 = vpop.f32.mrb[0].mxu0
    %v919 = vadd.f32 %v786, %v918
    %v920 = vpop.f32.mrb[0].mxu0
    %v921 = vpop.f32.mrb[0].mxu0
    %v922 = vadd.f32 %v786, %v921
    %v923 = vpop.f32.mrb[0].mxu0
    %924 = vmatprep.mubr.bf16.mxu0 0
    %925 = vmatmul.mubr.bf16.gmra.mrb[0].mxu0 %v740
    %v926 = vpop.f32.mrb[0].mxu0
    %v927 = vadd.f32 %v786, %v926
    %v928 = vpop.f32.mrb[0].mxu0
    %v929 = vpop.f32.mrb[0].mxu0
    %v930 = vadd.f32 %v786, %v929
    %v931 = vpop.f32.mrb[0].mxu0
    %932 = vmatprep.mubr.bf16.mxu0 0
    %933 = vmatmul.mubr.bf16.gmra.mrb[0].mxu0 %v741
    %v934 = vpop.f32.mrb[0].mxu0
    %v935 = vadd.f32 %v786, %v934
    %v936 = vpop.f32.mrb[0].mxu0
    %v937 = vpop.f32.mrb[0].mxu0
    %v938 = vadd.f32 %v786, %v937
    %v939 = vpop.f32.mrb[0].mxu0
    %940 = vmatprep.mubr.bf16.mxu0 0
    %941 = vmatmul.mubr.bf16.gmra.mrb[0].mxu0 %v742
    %v942 = vpop.f32.mrb[0].mxu0
    %v943 = vadd.f32 %v786, %v942
    %v944 = vpop.f32.mrb[0].mxu0
    %v945 = vpop.f32.mrb[0].mxu0
    %v946 = vadd.f32 %v786, %v945
    %v947 = vpop.f32.mrb[0].mxu0
    %948 = vmatprep.mubr.bf16.mxu0 0
    %949 = vmatmul.mubr.bf16.gmra.mrb[0].mxu0 %v743
    %v950 = vpop.f32.mrb[0].mxu0
    %v951 = vadd.f32 %v786, %v950
    %v952 = vpop.f32.mrb[0].mxu0
    %v953 = vpop.f32.mrb[0].mxu0
    %v954 = vadd.f32 %v786, %v953
    %v955 = vpop.f32.mrb[0].mxu0
    %956 = vmatprep.mubr.bf16.mxu0 0
    %957 = vmatmul.mubr.bf16.gmra.mrb[0].mxu0 %v744
    %v958 = vpop.f32.mrb[0].mxu0
    %v959 = vadd.f32 %v786, %v958
    %v960 = vpop.f32.mrb[0].mxu0
    %v961 = vpop.f32.mrb[0].mxu0
    %v962 = vadd.f32 %v786, %v961
    %v963 = vpop.f32.mrb[0].mxu0
    %964 = vmatprep.mubr.bf16.mxu0 0
    %965 = vmatmul.mubr.bf16.gmra.mrb[0].mxu0 %v745
    %v966 = vpop.f32.mrb[0].mxu0
    %v967 = vadd.f32 %v786, %v966
    %v968 = vpop.f32.mrb[0].mxu0
    %v969 = vpop.f32.mrb[0].mxu0
    %v970 = vadd.f32 %v786, %v969
    %v971 = vpop.f32.mrb[0].mxu0
    %972 = vmatprep.mubr.bf16.mxu0 0
    %973 = vmatmul.mubr.bf16.gmra.mrb[0].mxu0 %v746
    %v974 = vpop.f32.mrb[0].mxu0
    %v975 = vadd.f32 %v786, %v974
    %v976 = vpop.f32.mrb[0].mxu0
    %v977 = vpop.f32.mrb[0].mxu0
    %v978 = vadd.f32 %v786, %v977
    %v979 = vpop.f32.mrb[0].mxu0
    %980 = vmatprep.mubr.bf16.mxu0 0
    %981 = vmatmul.mubr.bf16.gmra.mrb[0].mxu0 %v747
    %v982 = vpop.f32.mrb[0].mxu0
    %v983 = vadd.f32 %v786, %v982
    %v984 = vpop.f32.mrb[0].mxu0
    %v985 = vpop.f32.mrb[0].mxu0
    %v986 = vadd.f32 %v786, %v985
    %v987 = vpop.f32.mrb[0].mxu0
    %988 = vmatprep.mubr.bf16.mxu0 0
    %989 = vmatmul.mubr.bf16.gmra.mrb[0].mxu0 %v748
    %v990 = vpop.f32.mrb[0].mxu0
    %v991 = vadd.f32 %v786, %v990
    %v992 = vpop.f32.mrb[0].mxu0
    %v993 = vpop.f32.mrb[0].mxu0
    %v994 = vadd.f32 %v786, %v993
    %v995 = vpop.f32.mrb[0].mxu0
    %996 = vmatprep.mubr.bf16.mxu0 0
    %997 = vmatmul.mubr.bf16.gmra.mrb[0].mxu0 %v749
    %v998 = vpop.f32.mrb[0].mxu0
    %v999 = vadd.f32 %v786, %v998
    %v1000 = vpop.f32.mrb[0].mxu0
    %v1001 = vpop.f32.mrb[0].mxu0
    %v1002 = vadd.f32 %v786, %v1001
    %v1003 = vpop.f32.mrb[0].mxu0
    %1004 = vmatprep.mubr.bf16.mxu0 0
    %1005 = vmatmul.mubr.bf16.gmra.mrb[0].mxu0 %v750
    %v1006 = vpop.f32.mrb[0].mxu0
    %v1007 = vadd.f32 %v786, %v1006
    %v1008 = vpop.f32.mrb[0].mxu0
    %v1009 = vpop.f32.mrb[0].mxu0
    %v1010 = vadd.f32 %v786, %v1009
    %v1011 = vpop.f32.mrb[0].mxu0
    %1012 = vmatprep.mubr.bf16.mxu0 0
    %1013 = vmatmul.mubr.bf16.gmra.mrb[0].mxu0 %v751
    %v1014 = vpop.f32.mrb[0].mxu0
    %v1015 = vadd.f32 %v786, %v1014
    %v1016 = vpop.f32.mrb[0].mxu0
    %v1017 = vpop.f32.mrb[0].mxu0
    %v1018 = vadd.f32 %v786, %v1017
    %v1019 = vpop.f32.mrb[0].mxu0
    %1020 = vmatprep.mubr.bf16.mxu0 0
    %1021 = vmatmul.mubr.bf16.gmra.mrb[0].mxu0 %v752
    %v1022 = vpop.f32.mrb[0].mxu0
    %v1023 = vadd.f32 %v786, %v1022
    %v1024 = vpop.f32.mrb[0].mxu0
    %v1025 = vpop.f32.mrb[0].mxu0
    %v1026 = vadd.f32 %v786, %v1025
    %v1027 = vpop.f32.mrb[0].mxu0
    %1028 = vmatprep.mubr.bf16.mxu0 0
    %1029 = vmatmul.mubr.bf16.gmra.mrb[0].mxu0 %v753
    %v1030 = vpop.f32.mrb[0].mxu0
    %v1031 = vadd.f32 %v786, %v1030
    %v1032 = vpop.f32.mrb[0].mxu0
    %v1033 = vpop.f32.mrb[0].mxu0
    %v1034 = vadd.f32 %v786, %v1033
    %v1035 = vpop.f32.mrb[0].mxu0
    %1036 = vmatprep.mubr.bf16.mxu0 0
    %1037 = vmatmul.mubr.bf16.gmra.mrb[0].mxu0 %v754
    %v1038 = vpop.f32.mrb[0].mxu0
    %v1039 = vadd.f32 %v786, %v1038
    %v1040 = vpop.f32.mrb[0].mxu0
    %v1041 = vpop.f32.mrb[0].mxu0
    %v1042 = vadd.f32 %v786, %v1041
    %v1043 = vpop.f32.mrb[0].mxu0
    %1044 = vmatprep.mubr.bf16.mxu0 0
    %1045 = vmatmul.mubr.bf16.gmra.mrb[0].mxu0 %v755
    %v1046 = vpop.f32.mrb[0].mxu0
    %v1047 = vadd.f32 %v786, %v1046
    %v1048 = vpop.f32.mrb[0].mxu0
    %v1049 = vpop.f32.mrb[0].mxu0
    %v1050 = vadd.f32 %v786, %v1049
    %v1051 = vpop.f32.mrb[0].mxu0
    %1052 = vmatprep.mubr.bf16.mxu0 0
    %1053 = vmatmul.mubr.bf16.gmra.mrb[0].mxu0 %v756
    %v1054 = vpop.f32.mrb[0].mxu0
    %v1055 = vadd.f32 %v786, %v1054
    %v1056 = vpop.f32.mrb[0].mxu0
    %v1057 = vpop.f32.mrb[0].mxu0
    %v1058 = vadd.f32 %v786, %v1057
    %v1059 = vpop.f32.mrb[0].mxu0
    %1060 = vmatprep.mubr.bf16.mxu0 0
    %1061 = vmatmul.mubr.bf16.gmra.mrb[0].mxu0 %v757
    %v1062 = vpop.f32.mrb[0].mxu0
    %v1063 = vadd.f32 %v786, %v1062
    %v1064 = vpop.f32.mrb[0].mxu0
    %v1065 = vpop.f32.mrb[0].mxu0
    %v1066 = vadd.f32 %v786, %v1065
    %v1067 = vpop.f32.mrb[0].mxu0
    %1068 = vmatprep.mubr.bf16.mxu0 0
    %1069 = vmatmul.mubr.bf16.gmra.mrb[0].mxu0 %v758
    %v1070 = vpop.f32.mrb[0].mxu0
    %v1071 = vadd.f32 %v786, %v1070
    %v1072 = vpop.f32.mrb[0].mxu0
    %v1073 = vpop.f32.mrb[0].mxu0
    %v1074 = vadd.f32 %v786, %v1073
    %v1075 = vpop.f32.mrb[0].mxu0
    %1076 = vmatprep.mubr.bf16.mxu0 0
    %1077 = vmatmul.mubr.bf16.gmra.mrb[0].mxu0 %v759
    %v1078 = vpop.f32.mrb[0].mxu0
    %v1079 = vadd.f32 %v786, %v1078
    %v1080 = vpop.f32.mrb[0].mxu0
    %v1081 = vpop.f32.mrb[0].mxu0
    %v1082 = vadd.f32 %v786, %v1081
    %v1083 = vpop.f32.mrb[0].mxu0
    %1084 = vmatprep.mubr.bf16.mxu0 0
    %1085 = vmatmul.mubr.bf16.gmra.mrb[0].mxu0 %v760
    %v1086 = vpop.f32.mrb[0].mxu0
    %v1087 = vadd.f32 %v786, %v1086
    %v1088 = vpop.f32.mrb[0].mxu0
    %v1089 = vpop.f32.mrb[0].mxu0
    %v1090 = vadd.f32 %v786, %v1089
    %v1091 = vpop.f32.mrb[0].mxu0
    %1092 = vmatprep.mubr.bf16.mxu0 0
    %1093 = vmatmul.mubr.bf16.gmra.mrb[0].mxu0 %v761
    %v1094 = vpop.f32.mrb[0].mxu0
    %v1095 = vadd.f32 %v786, %v1094
    %v1096 = vpop.f32.mrb[0].mxu0
    %v1097 = vpop.f32.mrb[0].mxu0
    %v1098 = vadd.f32 %v786, %v1097
    %v1099 = vpop.f32.mrb[0].mxu0
    %1100 = vmatprep.mubr.bf16.mxu0 0
    %1101 = vmatmul.mubr.bf16.gmra.mrb[0].mxu0 %v762
    %v1102 = vpop.f32.mrb[0].mxu0
    %v1103 = vadd.f32 %v786, %v1102
    %v1104 = vpop.f32.mrb[0].mxu0
    %v1105 = vpop.f32.mrb[0].mxu0
    %v1106 = vadd.f32 %v786, %v1105
    %v1107 = vpop.f32.mrb[0].mxu0
    %1108 = vmatprep.mubr.bf16.mxu0 0
    %1109 = vmatmul.mubr.bf16.gmra.mrb[0].mxu0 %v763
    %v1110 = vpop.f32.mrb[0].mxu0
    %v1111 = vadd.f32 %v786, %v1110
    %v1112 = vpop.f32.mrb[0].mxu0
    %v1113 = vpop.f32.mrb[0].mxu0
    %v1114 = vadd.f32 %v786, %v1113
    %v1115 = vpop.f32.mrb[0].mxu0
    %1116 = vmatprep.mubr.bf16.mxu0 0
    %1117 = vmatmul.mubr.bf16.gmra.mrb[0].mxu0 %v764
    %v1118 = vpop.f32.mrb[0].mxu0
    %v1119 = vadd.f32 %v786, %v1118
    %v1120 = vpop.f32.mrb[0].mxu0
    %v1121 = vpop.f32.mrb[0].mxu0
    %v1122 = vadd.f32 %v786, %v1121
    %v1123 = vpop.f32.mrb[0].mxu0
    %1124 = vdwg.mxu0
    %vm1125 = vcmp.gt.f32.partialorder %v871, 0.0
    %vm1126 = vcmp.gt.f32.partialorder %v874, 0.0
    %vm1127 = vcmp.gt.f32.partialorder %v879, 0.0
    %vm1128 = vcmp.gt.f32.partialorder %v882, 0.0
    %vm1129 = vcmp.gt.f32.partialorder %v887, 0.0
    %vm1130 = vcmp.gt.f32.partialorder %v890, 0.0
    %vm1131 = vcmp.gt.f32.partialorder %v895, 0.0
    %vm1132 = vcmp.gt.f32.partialorder %v898, 0.0
    %vm1133 = vcmp.gt.f32.partialorder %v903, 0.0
    %vm1134 = vcmp.gt.f32.partialorder %v906, 0.0
    %vm1135 = vcmp.gt.f32.partialorder %v911, 0.0
    %vm1136 = vcmp.gt.f32.partialorder %v914, 0.0
    %vm1137 = vcmp.gt.f32.partialorder %v919, 0.0
    %vm1138 = vcmp.gt.f32.partialorder %v922, 0.0
    %vm1139 = vcmp.gt.f32.partialorder %v927, 0.0
    %vm1140 = vcmp.gt.f32.partialorder %v930, 0.0
    %vm1141 = vcmp.gt.f32.partialorder %v935, 0.0
    %vm1142 = vcmp.gt.f32.partialorder %v938, 0.0
    %vm1143 = vcmp.gt.f32.partialorder %v943, 0.0
    %vm1144 = vcmp.gt.f32.partialorder %v946, 0.0
    %vm1145 = vcmp.gt.f32.partialorder %v951, 0.0
    %vm1146 = vcmp.gt.f32.partialorder %v954, 0.0
    %vm1147 = vcmp.gt.f32.partialorder %v959, 0.0
    %vm1148 = vcmp.gt.f32.partialorder %v962, 0.0
    %vm1149 = vcmp.gt.f32.partialorder %v967, 0.0
    %vm1150 = vcmp.gt.f32.partialorder %v970, 0.0
    %vm1151 = vcmp.gt.f32.partialorder %v975, 0.0
    %vm1152 = vcmp.gt.f32.partialorder %v978, 0.0
    %vm1153 = vcmp.gt.f32.partialorder %v983, 0.0
    %vm1154 = vcmp.gt.f32.partialorder %v986, 0.0
    %vm1155 = vcmp.gt.f32.partialorder %v991, 0.0
    %vm1156 = vcmp.gt.f32.partialorder %v994, 0.0
    %vm1157 = vcmp.gt.f32.partialorder %v999, 0.0
    %vm1158 = vcmp.gt.f32.partialorder %v1002, 0.0
    %vm1159 = vcmp.gt.f32.partialorder %v1007, 0.0
    %vm1160 = vcmp.gt.f32.partialorder %v1010, 0.0
    %vm1161 = vcmp.gt.f32.partialorder %v1015, 0.0
    %vm1162 = vcmp.gt.f32.partialorder %v1018, 0.0
    %vm1163 = vcmp.gt.f32.partialorder %v1023, 0.0
    %vm1164 = vcmp.gt.f32.partialorder %v1026, 0.0
    %vm1165 = vcmp.gt.f32.partialorder %v1031, 0.0
    %vm1166 = vcmp.gt.f32.partialorder %v1034, 0.0
    %vm1167 = vcmp.gt.f32.partialorder %v1039, 0.0
    %vm1168 = vcmp.gt.f32.partialorder %v1042, 0.0
    %vm1169 = vcmp.gt.f32.partialorder %v1047, 0.0
    %vm1170 = vcmp.gt.f32.partialorder %v1050, 0.0
    %vm1171 = vcmp.gt.f32.partialorder %v1055, 0.0
    %vm1172 = vcmp.gt.f32.partialorder %v1058, 0.0
    %vm1173 = vcmp.gt.f32.partialorder %v1063, 0.0
    %vm1174 = vcmp.gt.f32.partialorder %v1066, 0.0
    %vm1175 = vcmp.gt.f32.partialorder %v1071, 0.0
    %vm1176 = vcmp.gt.f32.partialorder %v1074, 0.0
    %vm1177 = vcmp.gt.f32.partialorder %v1079, 0.0
    %vm1178 = vcmp.gt.f32.partialorder %v1082, 0.0
    %vm1179 = vcmp.gt.f32.partialorder %v1087, 0.0
    %vm1180 = vcmp.gt.f32.partialorder %v1090, 0.0
    %vm1181 = vcmp.gt.f32.partialorder %v1095, 0.0
    %vm1182 = vcmp.gt.f32.partialorder %v1098, 0.0
    %vm1183 = vcmp.gt.f32.partialorder %v1103, 0.0
    %vm1184 = vcmp.gt.f32.partialorder %v1106, 0.0
    %vm1185 = vcmp.gt.f32.partialorder %v1111, 0.0
    %vm1186 = vcmp.gt.f32.partialorder %v1114, 0.0
    %vm1187 = vcmp.gt.f32.partialorder %v1119, 0.0
    %vm1188 = vcmp.gt.f32.partialorder %v1122, 0.0
    %v1189 = vmul.f32 %v871, 0.01
    %v1190 = vmul.f32 %v874, 0.01
    %v1191 = vmul.f32 %v879, 0.01
    %v1192 = vmul.f32 %v882, 0.01
    %v1193 = vmul.f32 %v887, 0.01
    %v1194 = vmul.f32 %v890, 0.01
    %v1195 = vmul.f32 %v895, 0.01
    %v1196 = vmul.f32 %v898, 0.01
    %v1197 = vmul.f32 %v903, 0.01
    %v1198 = vmul.f32 %v906, 0.01
    %v1199 = vmul.f32 %v911, 0.01
    %v1200 = vmul.f32 %v914, 0.01
    %v1201 = vmul.f32 %v919, 0.01
    %v1202 = vmul.f32 %v922, 0.01
    %v1203 = vmul.f32 %v927, 0.01
    %v1204 = vmul.f32 %v930, 0.01
    %v1205 = vmul.f32 %v935, 0.01
    %v1206 = vmul.f32 %v938, 0.01
    %v1207 = vmul.f32 %v943, 0.01
    %v1208 = vmul.f32 %v946, 0.01
    %v1209 = vmul.f32 %v951, 0.01
    %v1210 = vmul.f32 %v954, 0.01
    %v1211 = vmul.f32 %v959, 0.01
    %v1212 = vmul.f32 %v962, 0.01
    %v1213 = vmul.f32 %v967, 0.01
    %v1214 = vmul.f32 %v970, 0.01
    %v1215 = vmul.f32 %v975, 0.01
    %v1216 = vmul.f32 %v978, 0.01
    %v1217 = vmul.f32 %v983, 0.01
    %v1218 = vmul.f32 %v986, 0.01
    %v1219 = vmul.f32 %v991, 0.01
    %v1220 = vmul.f32 %v994, 0.01
    %v1221 = vmul.f32 %v999, 0.01
    %v1222 = vmul.f32 %v1002, 0.01
    %v1223 = vmul.f32 %v1007, 0.01
    %v1224 = vmul.f32 %v1010, 0.01
    %v1225 = vmul.f32 %v1015, 0.01
    %v1226 = vmul.f32 %v1018, 0.01
    %v1227 = vmul.f32 %v1023, 0.01
    %v1228 = vmul.f32 %v1026, 0.01
    %v1229 = vmul.f32 %v1031, 0.01
    %v1230 = vmul.f32 %v1034, 0.01
    %v1231 = vmul.f32 %v1039, 0.01
    %v1232 = vmul.f32 %v1042, 0.01
    %v1233 = vmul.f32 %v1047, 0.01
    %v1234 = vmul.f32 %v1050, 0.01
    %v1235 = vmul.f32 %v1055, 0.01
    %v1236 = vmul.f32 %v1058, 0.01
    %v1237 = vmul.f32 %v1063, 0.01
    %v1238 = vmul.f32 %v1066, 0.01
    %v1239 = vmul.f32 %v1071, 0.01
    %v1240 = vmul.f32 %v1074, 0.01
    %v1241 = vmul.f32 %v1079, 0.01
    %v1242 = vmul.f32 %v1082, 0.01
    %v1243 = vmul.f32 %v1087, 0.01
    %v1244 = vmul.f32 %v1090, 0.01
    %v1245 = vmul.f32 %v1095, 0.01
    %v1246 = vmul.f32 %v1098, 0.01
    %v1247 = vmul.f32 %v1103, 0.01
    %v1248 = vmul.f32 %v1106, 0.01
    %v1249 = vmul.f32 %v1111, 0.01
    %v1250 = vmul.f32 %v1114, 0.01
    %v1251 = vmul.f32 %v1119, 0.01
    %v1252 = vmul.f32 %v1122, 0.01
    %v1253 = vsel %vm1125, %v871, %v1189
    %v1254 = vsel %vm1126, %v874, %v1190
    %v1255 = vsel %vm1127, %v879, %v1191
    %v1256 = vsel %vm1128, %v882, %v1192
    %v1257 = vsel %vm1129, %v887, %v1193
    %v1258 = vsel %vm1130, %v890, %v1194
    %v1259 = vsel %vm1131, %v895, %v1195
    %v1260 = vsel %vm1132, %v898, %v1196
    %v1261 = vsel %vm1133, %v903, %v1197
    %v1262 = vsel %vm1134, %v906, %v1198
    %v1263 = vsel %vm1135, %v911, %v1199
    %v1264 = vsel %vm1136, %v914, %v1200
    %v1265 = vsel %vm1137, %v919, %v1201
    %v1266 = vsel %vm1138, %v922, %v1202
    %v1267 = vsel %vm1139, %v927, %v1203
    %v1268 = vsel %vm1140, %v930, %v1204
    %v1269 = vsel %vm1141, %v935, %v1205
    %v1270 = vsel %vm1142, %v938, %v1206
    %v1271 = vsel %vm1143, %v943, %v1207
    %v1272 = vsel %vm1144, %v946, %v1208
    %v1273 = vsel %vm1145, %v951, %v1209
    %v1274 = vsel %vm1146, %v954, %v1210
    %v1275 = vsel %vm1147, %v959, %v1211
    %v1276 = vsel %vm1148, %v962, %v1212
    %v1277 = vsel %vm1149, %v967, %v1213
    %v1278 = vsel %vm1150, %v970, %v1214
    %v1279 = vsel %vm1151, %v975, %v1215
    %v1280 = vsel %vm1152, %v978, %v1216
    %v1281 = vsel %vm1153, %v983, %v1217
    %v1282 = vsel %vm1154, %v986, %v1218
    %v1283 = vsel %vm1155, %v991, %v1219
    %v1284 = vsel %vm1156, %v994, %v1220
    %v1285 = vsel %vm1157, %v999, %v1221
    %v1286 = vsel %vm1158, %v1002, %v1222
    %v1287 = vsel %vm1159, %v1007, %v1223
    %v1288 = vsel %vm1160, %v1010, %v1224
    %v1289 = vsel %vm1161, %v1015, %v1225
    %v1290 = vsel %vm1162, %v1018, %v1226
    %v1291 = vsel %vm1163, %v1023, %v1227
    %v1292 = vsel %vm1164, %v1026, %v1228
    %v1293 = vsel %vm1165, %v1031, %v1229
    %v1294 = vsel %vm1166, %v1034, %v1230
    %v1295 = vsel %vm1167, %v1039, %v1231
    %v1296 = vsel %vm1168, %v1042, %v1232
    %v1297 = vsel %vm1169, %v1047, %v1233
    %v1298 = vsel %vm1170, %v1050, %v1234
    %v1299 = vsel %vm1171, %v1055, %v1235
    %v1300 = vsel %vm1172, %v1058, %v1236
    %v1301 = vsel %vm1173, %v1063, %v1237
    %v1302 = vsel %vm1174, %v1066, %v1238
    %v1303 = vsel %vm1175, %v1071, %v1239
    %v1304 = vsel %vm1176, %v1074, %v1240
    %v1305 = vsel %vm1177, %v1079, %v1241
    %v1306 = vsel %vm1178, %v1082, %v1242
    %v1307 = vsel %vm1179, %v1087, %v1243
    %v1308 = vsel %vm1180, %v1090, %v1244
    %v1309 = vsel %vm1181, %v1095, %v1245
    %v1310 = vsel %vm1182, %v1098, %v1246
    %v1311 = vsel %vm1183, %v1103, %v1247
    %v1312 = vsel %vm1184, %v1106, %v1248
    %v1313 = vsel %vm1185, %v1111, %v1249
    %v1314 = vsel %vm1186, %v1114, %v1250
    %v1315 = vsel %vm1187, %v1119, %v1251
    %v1316 = vsel %vm1188, %v1122, %v1252
    %v1317 = vpack.c.bf16 %v1254, %v1253
    %v1318 = vpack.c.bf16 %v1256, %v1255
    %v1319 = vpack.c.bf16 %v1258, %v1257
    %v1320 = vpack.c.bf16 %v1260, %v1259
    %v1321 = vpack.c.bf16 %v1262, %v1261
    %v1322 = vpack.c.bf16 %v1264, %v1263
    %v1323 = vpack.c.bf16 %v1266, %v1265
    %v1324 = vpack.c.bf16 %v1268, %v1267
    %v1325 = vpack.c.bf16 %v1270, %v1269
    %v1326 = vpack.c.bf16 %v1272, %v1271
    %v1327 = vpack.c.bf16 %v1274, %v1273
    %v1328 = vpack.c.bf16 %v1276, %v1275
    %v1329 = vpack.c.bf16 %v1278, %v1277
    %v1330 = vpack.c.bf16 %v1280, %v1279
    %v1331 = vpack.c.bf16 %v1282, %v1281
    %v1332 = vpack.c.bf16 %v1284, %v1283
    %v1333 = vpack.c.bf16 %v1286, %v1285
    %v1334 = vpack.c.bf16 %v1288, %v1287
    %v1335 = vpack.c.bf16 %v1290, %v1289
    %v1336 = vpack.c.bf16 %v1292, %v1291
    %v1337 = vpack.c.bf16 %v1294, %v1293
    %v1338 = vpack.c.bf16 %v1296, %v1295
    %v1339 = vpack.c.bf16 %v1298, %v1297
    %v1340 = vpack.c.bf16 %v1300, %v1299
    %v1341 = vpack.c.bf16 %v1302, %v1301
    %v1342 = vpack.c.bf16 %v1304, %v1303
    %v1343 = vpack.c.bf16 %v1306, %v1305
    %v1344 = vpack.c.bf16 %v1308, %v1307
    %v1345 = vpack.c.bf16 %v1310, %v1309
    %v1346 = vpack.c.bf16 %v1312, %v1311
    %v1347 = vpack.c.bf16 %v1314, %v1313
    %v1348 = vpack.c.bf16 %v1316, %v1315
    %v1349 = vld [vmem:[%s5] sm:$0xf]
    %v1350 = vld [vmem:[%s5 + $0x4] sm:$0xf]
    %v1351 = vld [vmem:[%s5 + $0x8] sm:$0xf]
    %v1352 = vld [vmem:[%s5 + $0xc] sm:$0xf]
    %v1353 = vld [vmem:[%s5 + $0x10] sm:$0xf]
    %v1354 = vld [vmem:[%s5 + $0x14] sm:$0xf]
    %v1355 = vld [vmem:[%s5 + $0x18] sm:$0xf]
    %v1356 = vld [vmem:[%s5 + $0x1c] sm:$0xf]
    %v1357 = vld [vmem:[%s5 + $0x20] sm:$0xf]
    %v1358 = vld [vmem:[%s5 + $0x24] sm:$0xf]
    %v1359 = vld [vmem:[%s5 + $0x28] sm:$0xf]
    %v1360 = vld [vmem:[%s5 + $0x2c] sm:$0xf]
    %v1361 = vld [vmem:[%s5 + $0x30] sm:$0xf]
    %v1362 = vld [vmem:[%s5 + $0x34] sm:$0xf]
    %v1363 = vld [vmem:[%s5 + $0x38] sm:$0xf]
    %v1364 = vld [vmem:[%s5 + $0x3c] sm:$0xf]
    %v1365 = vld [vmem:[%s6] sm:$0x1]
    %v1367 = vlaneseq
    %v1368 = vshrl.u32 %v1367, 7
    %v1369 = vsub.s32 0, %v1368
    %v1370 = vrot.slane %v1365, %v1369
    %v1388 = vunpack.c.l.b16 %v1349
    %v1389 = vunpack.c.l.b16 %v1350
    %v1390 = vunpack.c.l.b16 %v1351
    %v1391 = vunpack.c.l.b16 %v1352
    %v1392 = vunpack.c.l.b16 %v1353
    %v1393 = vunpack.c.l.b16 %v1354
    %v1394 = vunpack.c.l.b16 %v1355
    %v1395 = vunpack.c.l.b16 %v1356
    %v1396 = vunpack.c.l.b16 %v1357
    %v1397 = vunpack.c.l.b16 %v1358
    %v1398 = vunpack.c.l.b16 %v1359
    %v1399 = vunpack.c.l.b16 %v1360
    %v1400 = vunpack.c.l.b16 %v1361
    %v1401 = vunpack.c.l.b16 %v1362
    %v1402 = vunpack.c.l.b16 %v1363
    %v1403 = vunpack.c.l.b16 %v1364
    %v1404 = vpack.c.b16 %v1389, %v1388
    %v1405 = vpack.c.b16 %v1391, %v1390
    %v1406 = vpack.c.b16 %v1393, %v1392
    %v1407 = vpack.c.b16 %v1395, %v1394
    %v1408 = vpack.c.b16 %v1397, %v1396
    %v1409 = vpack.c.b16 %v1399, %v1398
    %v1410 = vpack.c.b16 %v1401, %v1400
    %v1411 = vpack.c.b16 %v1403, %v1402
    %1420 = vmatprep.subr.bf16.mxu0 0
    %1421 = vmatpush1.bf16.msra.mxu0 %v1404
    %1422 = vmatprep.subr.bf16.mxu0 0
    %1423 = vmatpush1.bf16.msra.mxu0 %v1405
    %1424 = vmatprep.subr.bf16.mxu0 0
    %1425 = vmatpush1.bf16.msra.mxu0 %v1406
    %1426 = vmatprep.subr.bf16.mxu0 0
    %1427 = vmatpush1.bf16.msra.mxu0 %v1407
    %1428 = vmatprep.subr.bf16.mxu0 0
    %1429 = vmatpush1.bf16.msra.mxu0 %v1408
    %1430 = vmatprep.subr.bf16.mxu0 0
    %1431 = vmatpush1.bf16.msra.mxu0 %v1409
    %1432 = vmatprep.subr.bf16.mxu0 0
    %1433 = vmatpush1.bf16.msra.mxu0 %v1410
    %1434 = vmatprep.subr.bf16.mxu0 0
    %1435 = vmatpush1.bf16.msra.mxu0 %v1411
    %1436 = vmatprep.subr.bf16.mxu0 0
    %1437 = vmatpush1.bf16.msra.mxu0 0
    %1438 = vmatprep.subr.bf16.mxu0 0
    %1439 = vmatpush1.bf16.msra.mxu0 0
    %1440 = vmatprep.subr.bf16.mxu0 0
    %1441 = vmatpush1.bf16.msra.mxu0 0
    %1442 = vmatprep.subr.bf16.mxu0 0
    %1443 = vmatpush1.bf16.msra.mxu0 0
    %1444 = vmatprep.subr.bf16.mxu0 0
    %1445 = vmatpush1.bf16.msra.mxu0 0
    %1446 = vmatprep.subr.bf16.mxu0 0
    %1447 = vmatpush1.bf16.msra.mxu0 0
    %1448 = vmatprep.subr.bf16.mxu0 0
    %1449 = vmatpush1.bf16.msra.mxu0 0
    %1450 = vmatprep.subr.bf16.mxu0 0
    %1451 = vmatpush1.bf16.msra.mxu0 0
    %1452 = vmatprep.mubr.bf16.mxu0 0
    %1453 = vmatmul.mubr.bf16.gmra.mrb[0].mxu0 %v1317
    %v1454 = vpop.f32.mrb[0].mxu0
    %v1455 = vadd.f32 %v1370, %v1454
    %v1456 = vpop.f32.mrb[0].mxu0
    %v1457 = vpop.f32.mrb[0].mxu0
    %v1458 = vadd.f32 %v1370, %v1457
    %v1459 = vpop.f32.mrb[0].mxu0
    %1460 = vmatprep.mubr.bf16.mxu0 0
    %1461 = vmatmul.mubr.bf16.gmra.mrb[0].mxu0 %v1318
    %v1462 = vpop.f32.mrb[0].mxu0
    %v1463 = vadd.f32 %v1370, %v1462
    %v1464 = vpop.f32.mrb[0].mxu0
    %v1465 = vpop.f32.mrb[0].mxu0
    %v1466 = vadd.f32 %v1370, %v1465
    %v1467 = vpop.f32.mrb[0].mxu0
    %1468 = vmatprep.mubr.bf16.mxu0 0
    %1469 = vmatmul.mubr.bf16.gmra.mrb[0].mxu0 %v1319
    %v1470 = vpop.f32.mrb[0].mxu0
    %v1471 = vadd.f32 %v1370, %v1470
    %v1472 = vpop.f32.mrb[0].mxu0
    %v1473 = vpop.f32.mrb[0].mxu0
    %v1474 = vadd.f32 %v1370, %v1473
    %v1475 = vpop.f32.mrb[0].mxu0
    %1476 = vmatprep.mubr.bf16.mxu0 0
    %1477 = vmatmul.mubr.bf16.gmra.mrb[0].mxu0 %v1320
    %v1478 = vpop.f32.mrb[0].mxu0
    %v1479 = vadd.f32 %v1370, %v1478
    %v1480 = vpop.f32.mrb[0].mxu0
    %v1481 = vpop.f32.mrb[0].mxu0
    %v1482 = vadd.f32 %v1370, %v1481
    %v1483 = vpop.f32.mrb[0].mxu0
    %1484 = vmatprep.mubr.bf16.mxu0 0
    %1485 = vmatmul.mubr.bf16.gmra.mrb[0].mxu0 %v1321
    %v1486 = vpop.f32.mrb[0].mxu0
    %v1487 = vadd.f32 %v1370, %v1486
    %v1488 = vpop.f32.mrb[0].mxu0
    %v1489 = vpop.f32.mrb[0].mxu0
    %v1490 = vadd.f32 %v1370, %v1489
    %v1491 = vpop.f32.mrb[0].mxu0
    %1492 = vmatprep.mubr.bf16.mxu0 0
    %1493 = vmatmul.mubr.bf16.gmra.mrb[0].mxu0 %v1322
    %v1494 = vpop.f32.mrb[0].mxu0
    %v1495 = vadd.f32 %v1370, %v1494
    %v1496 = vpop.f32.mrb[0].mxu0
    %v1497 = vpop.f32.mrb[0].mxu0
    %v1498 = vadd.f32 %v1370, %v1497
    %v1499 = vpop.f32.mrb[0].mxu0
    %1500 = vmatprep.mubr.bf16.mxu0 0
    %1501 = vmatmul.mubr.bf16.gmra.mrb[0].mxu0 %v1323
    %v1502 = vpop.f32.mrb[0].mxu0
    %v1503 = vadd.f32 %v1370, %v1502
    %v1504 = vpop.f32.mrb[0].mxu0
    %v1505 = vpop.f32.mrb[0].mxu0
    %v1506 = vadd.f32 %v1370, %v1505
    %v1507 = vpop.f32.mrb[0].mxu0
    %1508 = vmatprep.mubr.bf16.mxu0 0
    %1509 = vmatmul.mubr.bf16.gmra.mrb[0].mxu0 %v1324
    %v1510 = vpop.f32.mrb[0].mxu0
    %v1511 = vadd.f32 %v1370, %v1510
    %v1512 = vpop.f32.mrb[0].mxu0
    %v1513 = vpop.f32.mrb[0].mxu0
    %v1514 = vadd.f32 %v1370, %v1513
    %v1515 = vpop.f32.mrb[0].mxu0
    %1516 = vmatprep.mubr.bf16.mxu0 0
    %1517 = vmatmul.mubr.bf16.gmra.mrb[0].mxu0 %v1325
    %v1518 = vpop.f32.mrb[0].mxu0
    %v1519 = vadd.f32 %v1370, %v1518
    %v1520 = vpop.f32.mrb[0].mxu0
    %v1521 = vpop.f32.mrb[0].mxu0
    %v1522 = vadd.f32 %v1370, %v1521
    %v1523 = vpop.f32.mrb[0].mxu0
    %1524 = vmatprep.mubr.bf16.mxu0 0
    %1525 = vmatmul.mubr.bf16.gmra.mrb[0].mxu0 %v1326
    %v1526 = vpop.f32.mrb[0].mxu0
    %v1527 = vadd.f32 %v1370, %v1526
    %v1528 = vpop.f32.mrb[0].mxu0
    %v1529 = vpop.f32.mrb[0].mxu0
    %v1530 = vadd.f32 %v1370, %v1529
    %v1531 = vpop.f32.mrb[0].mxu0
    %1532 = vmatprep.mubr.bf16.mxu0 0
    %1533 = vmatmul.mubr.bf16.gmra.mrb[0].mxu0 %v1327
    %v1534 = vpop.f32.mrb[0].mxu0
    %v1535 = vadd.f32 %v1370, %v1534
    %v1536 = vpop.f32.mrb[0].mxu0
    %v1537 = vpop.f32.mrb[0].mxu0
    %v1538 = vadd.f32 %v1370, %v1537
    %v1539 = vpop.f32.mrb[0].mxu0
    %1540 = vmatprep.mubr.bf16.mxu0 0
    %1541 = vmatmul.mubr.bf16.gmra.mrb[0].mxu0 %v1328
    %v1542 = vpop.f32.mrb[0].mxu0
    %v1543 = vadd.f32 %v1370, %v1542
    %v1544 = vpop.f32.mrb[0].mxu0
    %v1545 = vpop.f32.mrb[0].mxu0
    %v1546 = vadd.f32 %v1370, %v1545
    %v1547 = vpop.f32.mrb[0].mxu0
    %1548 = vmatprep.mubr.bf16.mxu0 0
    %1549 = vmatmul.mubr.bf16.gmra.mrb[0].mxu0 %v1329
    %v1550 = vpop.f32.mrb[0].mxu0
    %v1551 = vadd.f32 %v1370, %v1550
    %v1552 = vpop.f32.mrb[0].mxu0
    %v1553 = vpop.f32.mrb[0].mxu0
    %v1554 = vadd.f32 %v1370, %v1553
    %v1555 = vpop.f32.mrb[0].mxu0
    %1556 = vmatprep.mubr.bf16.mxu0 0
    %1557 = vmatmul.mubr.bf16.gmra.mrb[0].mxu0 %v1330
    %v1558 = vpop.f32.mrb[0].mxu0
    %v1559 = vadd.f32 %v1370, %v1558
    %v1560 = vpop.f32.mrb[0].mxu0
    %v1561 = vpop.f32.mrb[0].mxu0
    %v1562 = vadd.f32 %v1370, %v1561
    %v1563 = vpop.f32.mrb[0].mxu0
    %1564 = vmatprep.mubr.bf16.mxu0 0
    %1565 = vmatmul.mubr.bf16.gmra.mrb[0].mxu0 %v1331
    %v1566 = vpop.f32.mrb[0].mxu0
    %v1567 = vadd.f32 %v1370, %v1566
    %v1568 = vpop.f32.mrb[0].mxu0
    %v1569 = vpop.f32.mrb[0].mxu0
    %v1570 = vadd.f32 %v1370, %v1569
    %v1571 = vpop.f32.mrb[0].mxu0
    %1572 = vmatprep.mubr.bf16.mxu0 0
    %1573 = vmatmul.mubr.bf16.gmra.mrb[0].mxu0 %v1332
    %v1574 = vpop.f32.mrb[0].mxu0
    %v1575 = vadd.f32 %v1370, %v1574
    %v1576 = vpop.f32.mrb[0].mxu0
    %v1577 = vpop.f32.mrb[0].mxu0
    %v1578 = vadd.f32 %v1370, %v1577
    %v1579 = vpop.f32.mrb[0].mxu0
    %1580 = vmatprep.mubr.bf16.mxu0 0
    %1581 = vmatmul.mubr.bf16.gmra.mrb[0].mxu0 %v1333
    %v1582 = vpop.f32.mrb[0].mxu0
    %v1583 = vadd.f32 %v1370, %v1582
    %v1584 = vpop.f32.mrb[0].mxu0
    %v1585 = vpop.f32.mrb[0].mxu0
    %v1586 = vadd.f32 %v1370, %v1585
    %v1587 = vpop.f32.mrb[0].mxu0
    %1588 = vmatprep.mubr.bf16.mxu0 0
    %1589 = vmatmul.mubr.bf16.gmra.mrb[0].mxu0 %v1334
    %v1590 = vpop.f32.mrb[0].mxu0
    %v1591 = vadd.f32 %v1370, %v1590
    %v1592 = vpop.f32.mrb[0].mxu0
    %v1593 = vpop.f32.mrb[0].mxu0
    %v1594 = vadd.f32 %v1370, %v1593
    %v1595 = vpop.f32.mrb[0].mxu0
    %1596 = vmatprep.mubr.bf16.mxu0 0
    %1597 = vmatmul.mubr.bf16.gmra.mrb[0].mxu0 %v1335
    %v1598 = vpop.f32.mrb[0].mxu0
    %v1599 = vadd.f32 %v1370, %v1598
    %v1600 = vpop.f32.mrb[0].mxu0
    %v1601 = vpop.f32.mrb[0].mxu0
    %v1602 = vadd.f32 %v1370, %v1601
    %v1603 = vpop.f32.mrb[0].mxu0
    %1604 = vmatprep.mubr.bf16.mxu0 0
    %1605 = vmatmul.mubr.bf16.gmra.mrb[0].mxu0 %v1336
    %v1606 = vpop.f32.mrb[0].mxu0
    %v1607 = vadd.f32 %v1370, %v1606
    %v1608 = vpop.f32.mrb[0].mxu0
    %v1609 = vpop.f32.mrb[0].mxu0
    %v1610 = vadd.f32 %v1370, %v1609
    %v1611 = vpop.f32.mrb[0].mxu0
    %1612 = vmatprep.mubr.bf16.mxu0 0
    %1613 = vmatmul.mubr.bf16.gmra.mrb[0].mxu0 %v1337
    %v1614 = vpop.f32.mrb[0].mxu0
    %v1615 = vadd.f32 %v1370, %v1614
    %v1616 = vpop.f32.mrb[0].mxu0
    %v1617 = vpop.f32.mrb[0].mxu0
    %v1618 = vadd.f32 %v1370, %v1617
    %v1619 = vpop.f32.mrb[0].mxu0
    %1620 = vmatprep.mubr.bf16.mxu0 0
    %1621 = vmatmul.mubr.bf16.gmra.mrb[0].mxu0 %v1338
    %v1622 = vpop.f32.mrb[0].mxu0
    %v1623 = vadd.f32 %v1370, %v1622
    %v1624 = vpop.f32.mrb[0].mxu0
    %v1625 = vpop.f32.mrb[0].mxu0
    %v1626 = vadd.f32 %v1370, %v1625
    %v1627 = vpop.f32.mrb[0].mxu0
    %1628 = vmatprep.mubr.bf16.mxu0 0
    %1629 = vmatmul.mubr.bf16.gmra.mrb[0].mxu0 %v1339
    %v1630 = vpop.f32.mrb[0].mxu0
    %v1631 = vadd.f32 %v1370, %v1630
    %v1632 = vpop.f32.mrb[0].mxu0
    %v1633 = vpop.f32.mrb[0].mxu0
    %v1634 = vadd.f32 %v1370, %v1633
    %v1635 = vpop.f32.mrb[0].mxu0
    %1636 = vmatprep.mubr.bf16.mxu0 0
    %1637 = vmatmul.mubr.bf16.gmra.mrb[0].mxu0 %v1340
    %v1638 = vpop.f32.mrb[0].mxu0
    %v1639 = vadd.f32 %v1370, %v1638
    %v1640 = vpop.f32.mrb[0].mxu0
    %v1641 = vpop.f32.mrb[0].mxu0
    %v1642 = vadd.f32 %v1370, %v1641
    %v1643 = vpop.f32.mrb[0].mxu0
    %1644 = vmatprep.mubr.bf16.mxu0 0
    %1645 = vmatmul.mubr.bf16.gmra.mrb[0].mxu0 %v1341
    %v1646 = vpop.f32.mrb[0].mxu0
    %v1647 = vadd.f32 %v1370, %v1646
    %v1648 = vpop.f32.mrb[0].mxu0
    %v1649 = vpop.f32.mrb[0].mxu0
    %v1650 = vadd.f32 %v1370, %v1649
    %v1651 = vpop.f32.mrb[0].mxu0
    %1652 = vmatprep.mubr.bf16.mxu0 0
    %1653 = vmatmul.mubr.bf16.gmra.mrb[0].mxu0 %v1342
    %v1654 = vpop.f32.mrb[0].mxu0
    %v1655 = vadd.f32 %v1370, %v1654
    %v1656 = vpop.f32.mrb[0].mxu0
    %v1657 = vpop.f32.mrb[0].mxu0
    %v1658 = vadd.f32 %v1370, %v1657
    %v1659 = vpop.f32.mrb[0].mxu0
    %1660 = vmatprep.mubr.bf16.mxu0 0
    %1661 = vmatmul.mubr.bf16.gmra.mrb[0].mxu0 %v1343
    %v1662 = vpop.f32.mrb[0].mxu0
    %v1663 = vadd.f32 %v1370, %v1662
    %v1664 = vpop.f32.mrb[0].mxu0
    %v1665 = vpop.f32.mrb[0].mxu0
    %v1666 = vadd.f32 %v1370, %v1665
    %v1667 = vpop.f32.mrb[0].mxu0
    %1668 = vmatprep.mubr.bf16.mxu0 0
    %1669 = vmatmul.mubr.bf16.gmra.mrb[0].mxu0 %v1344
    %v1670 = vpop.f32.mrb[0].mxu0
    %v1671 = vadd.f32 %v1370, %v1670
    %v1672 = vpop.f32.mrb[0].mxu0
    %v1673 = vpop.f32.mrb[0].mxu0
    %v1674 = vadd.f32 %v1370, %v1673
    %v1675 = vpop.f32.mrb[0].mxu0
    %1676 = vmatprep.mubr.bf16.mxu0 0
    %1677 = vmatmul.mubr.bf16.gmra.mrb[0].mxu0 %v1345
    %v1678 = vpop.f32.mrb[0].mxu0
    %v1679 = vadd.f32 %v1370, %v1678
    %v1680 = vpop.f32.mrb[0].mxu0
    %v1681 = vpop.f32.mrb[0].mxu0
    %v1682 = vadd.f32 %v1370, %v1681
    %v1683 = vpop.f32.mrb[0].mxu0
    %1684 = vmatprep.mubr.bf16.mxu0 0
    %1685 = vmatmul.mubr.bf16.gmra.mrb[0].mxu0 %v1346
    %v1686 = vpop.f32.mrb[0].mxu0
    %v1687 = vadd.f32 %v1370, %v1686
    %v1688 = vpop.f32.mrb[0].mxu0
    %v1689 = vpop.f32.mrb[0].mxu0
    %v1690 = vadd.f32 %v1370, %v1689
    %v1691 = vpop.f32.mrb[0].mxu0
    %1692 = vmatprep.mubr.bf16.mxu0 0
    %1693 = vmatmul.mubr.bf16.gmra.mrb[0].mxu0 %v1347
    %v1694 = vpop.f32.mrb[0].mxu0
    %v1695 = vadd.f32 %v1370, %v1694
    %v1696 = vpop.f32.mrb[0].mxu0
    %v1697 = vpop.f32.mrb[0].mxu0
    %v1698 = vadd.f32 %v1370, %v1697
    %v1699 = vpop.f32.mrb[0].mxu0
    %1700 = vmatprep.mubr.bf16.mxu0 0
    %1701 = vmatmul.mubr.bf16.gmra.mrb[0].mxu0 %v1348
    %v1702 = vpop.f32.mrb[0].mxu0
    %v1703 = vadd.f32 %v1370, %v1702
    %v1704 = vpop.f32.mrb[0].mxu0
    %v1705 = vpop.f32.mrb[0].mxu0
    %v1706 = vadd.f32 %v1370, %v1705
    %v1707 = vpop.f32.mrb[0].mxu0
    %1708 = vdwg.mxu0
    %vm1709 = vcmp.gt.f32.partialorder %v1455, 0.0
    %vm1710 = vcmp.gt.f32.partialorder %v1458, 0.0
    %vm1711 = vcmp.gt.f32.partialorder %v1463, 0.0
    %vm1712 = vcmp.gt.f32.partialorder %v1466, 0.0
    %vm1713 = vcmp.gt.f32.partialorder %v1471, 0.0
    %vm1714 = vcmp.gt.f32.partialorder %v1474, 0.0
    %vm1715 = vcmp.gt.f32.partialorder %v1479, 0.0
    %vm1716 = vcmp.gt.f32.partialorder %v1482, 0.0
    %vm1717 = vcmp.gt.f32.partialorder %v1487, 0.0
    %vm1718 = vcmp.gt.f32.partialorder %v1490, 0.0
    %vm1719 = vcmp.gt.f32.partialorder %v1495, 0.0
    %vm1720 = vcmp.gt.f32.partialorder %v1498, 0.0
    %vm1721 = vcmp.gt.f32.partialorder %v1503, 0.0
    %vm1722 = vcmp.gt.f32.partialorder %v1506, 0.0
    %vm1723 = vcmp.gt.f32.partialorder %v1511, 0.0
    %vm1724 = vcmp.gt.f32.partialorder %v1514, 0.0
    %vm1725 = vcmp.gt.f32.partialorder %v1519, 0.0
    %vm1726 = vcmp.gt.f32.partialorder %v1522, 0.0
    %vm1727 = vcmp.gt.f32.partialorder %v1527, 0.0
    %vm1728 = vcmp.gt.f32.partialorder %v1530, 0.0
    %vm1729 = vcmp.gt.f32.partialorder %v1535, 0.0
    %vm1730 = vcmp.gt.f32.partialorder %v1538, 0.0
    %vm1731 = vcmp.gt.f32.partialorder %v1543, 0.0
    %vm1732 = vcmp.gt.f32.partialorder %v1546, 0.0
    %vm1733 = vcmp.gt.f32.partialorder %v1551, 0.0
    %vm1734 = vcmp.gt.f32.partialorder %v1554, 0.0
    %vm1735 = vcmp.gt.f32.partialorder %v1559, 0.0
    %vm1736 = vcmp.gt.f32.partialorder %v1562, 0.0
    %vm1737 = vcmp.gt.f32.partialorder %v1567, 0.0
    %vm1738 = vcmp.gt.f32.partialorder %v1570, 0.0
    %vm1739 = vcmp.gt.f32.partialorder %v1575, 0.0
    %vm1740 = vcmp.gt.f32.partialorder %v1578, 0.0
    %vm1741 = vcmp.gt.f32.partialorder %v1583, 0.0
    %vm1742 = vcmp.gt.f32.partialorder %v1586, 0.0
    %vm1743 = vcmp.gt.f32.partialorder %v1591, 0.0
    %vm1744 = vcmp.gt.f32.partialorder %v1594, 0.0
    %vm1745 = vcmp.gt.f32.partialorder %v1599, 0.0
    %vm1746 = vcmp.gt.f32.partialorder %v1602, 0.0
    %vm1747 = vcmp.gt.f32.partialorder %v1607, 0.0
    %vm1748 = vcmp.gt.f32.partialorder %v1610, 0.0
    %vm1749 = vcmp.gt.f32.partialorder %v1615, 0.0
    %vm1750 = vcmp.gt.f32.partialorder %v1618, 0.0
    %vm1751 = vcmp.gt.f32.partialorder %v1623, 0.0
    %vm1752 = vcmp.gt.f32.partialorder %v1626, 0.0
    %vm1753 = vcmp.gt.f32.partialorder %v1631, 0.0
    %vm1754 = vcmp.gt.f32.partialorder %v1634, 0.0
    %vm1755 = vcmp.gt.f32.partialorder %v1639, 0.0
    %vm1756 = vcmp.gt.f32.partialorder %v1642, 0.0
    %vm1757 = vcmp.gt.f32.partialorder %v1647, 0.0
    %vm1758 = vcmp.gt.f32.partialorder %v1650, 0.0
    %vm1759 = vcmp.gt.f32.partialorder %v1655, 0.0
    %vm1760 = vcmp.gt.f32.partialorder %v1658, 0.0
    %vm1761 = vcmp.gt.f32.partialorder %v1663, 0.0
    %vm1762 = vcmp.gt.f32.partialorder %v1666, 0.0
    %vm1763 = vcmp.gt.f32.partialorder %v1671, 0.0
    %vm1764 = vcmp.gt.f32.partialorder %v1674, 0.0
    %vm1765 = vcmp.gt.f32.partialorder %v1679, 0.0
    %vm1766 = vcmp.gt.f32.partialorder %v1682, 0.0
    %vm1767 = vcmp.gt.f32.partialorder %v1687, 0.0
    %vm1768 = vcmp.gt.f32.partialorder %v1690, 0.0
    %vm1769 = vcmp.gt.f32.partialorder %v1695, 0.0
    %vm1770 = vcmp.gt.f32.partialorder %v1698, 0.0
    %vm1771 = vcmp.gt.f32.partialorder %v1703, 0.0
    %vm1772 = vcmp.gt.f32.partialorder %v1706, 0.0
    %v1773 = vmul.f32 %v1455, 0.01
    %v1774 = vmul.f32 %v1458, 0.01
    %v1775 = vmul.f32 %v1463, 0.01
    %v1776 = vmul.f32 %v1466, 0.01
    %v1777 = vmul.f32 %v1471, 0.01
    %v1778 = vmul.f32 %v1474, 0.01
    %v1779 = vmul.f32 %v1479, 0.01
    %v1780 = vmul.f32 %v1482, 0.01
    %v1781 = vmul.f32 %v1487, 0.01
    %v1782 = vmul.f32 %v1490, 0.01
    %v1783 = vmul.f32 %v1495, 0.01
    %v1784 = vmul.f32 %v1498, 0.01
    %v1785 = vmul.f32 %v1503, 0.01
    %v1786 = vmul.f32 %v1506, 0.01
    %v1787 = vmul.f32 %v1511, 0.01
    %v1788 = vmul.f32 %v1514, 0.01
    %v1789 = vmul.f32 %v1519, 0.01
    %v1790 = vmul.f32 %v1522, 0.01
    %v1791 = vmul.f32 %v1527, 0.01
    %v1792 = vmul.f32 %v1530, 0.01
    %v1793 = vmul.f32 %v1535, 0.01
    %v1794 = vmul.f32 %v1538, 0.01
    %v1795 = vmul.f32 %v1543, 0.01
    %v1796 = vmul.f32 %v1546, 0.01
    %v1797 = vmul.f32 %v1551, 0.01
    %v1798 = vmul.f32 %v1554, 0.01
    %v1799 = vmul.f32 %v1559, 0.01
    %v1800 = vmul.f32 %v1562, 0.01
    %v1801 = vmul.f32 %v1567, 0.01
    %v1802 = vmul.f32 %v1570, 0.01
    %v1803 = vmul.f32 %v1575, 0.01
    %v1804 = vmul.f32 %v1578, 0.01
    %v1805 = vmul.f32 %v1583, 0.01
    %v1806 = vmul.f32 %v1586, 0.01
    %v1807 = vmul.f32 %v1591, 0.01
    %v1808 = vmul.f32 %v1594, 0.01
    %v1809 = vmul.f32 %v1599, 0.01
    %v1810 = vmul.f32 %v1602, 0.01
    %v1811 = vmul.f32 %v1607, 0.01
    %v1812 = vmul.f32 %v1610, 0.01
    %v1813 = vmul.f32 %v1615, 0.01
    %v1814 = vmul.f32 %v1618, 0.01
    %v1815 = vmul.f32 %v1623, 0.01
    %v1816 = vmul.f32 %v1626, 0.01
    %v1817 = vmul.f32 %v1631, 0.01
    %v1818 = vmul.f32 %v1634, 0.01
    %v1819 = vmul.f32 %v1639, 0.01
    %v1820 = vmul.f32 %v1642, 0.01
    %v1821 = vmul.f32 %v1647, 0.01
    %v1822 = vmul.f32 %v1650, 0.01
    %v1823 = vmul.f32 %v1655, 0.01
    %v1824 = vmul.f32 %v1658, 0.01
    %v1825 = vmul.f32 %v1663, 0.01
    %v1826 = vmul.f32 %v1666, 0.01
    %v1827 = vmul.f32 %v1671, 0.01
    %v1828 = vmul.f32 %v1674, 0.01
    %v1829 = vmul.f32 %v1679, 0.01
    %v1830 = vmul.f32 %v1682, 0.01
    %v1831 = vmul.f32 %v1687, 0.01
    %v1832 = vmul.f32 %v1690, 0.01
    %v1833 = vmul.f32 %v1695, 0.01
    %v1834 = vmul.f32 %v1698, 0.01
    %v1835 = vmul.f32 %v1703, 0.01
    %v1836 = vmul.f32 %v1706, 0.01
    %v1837 = vsel %vm1709, %v1455, %v1773
    %v1838 = vsel %vm1710, %v1458, %v1774
    %v1839 = vsel %vm1711, %v1463, %v1775
    %v1840 = vsel %vm1712, %v1466, %v1776
    %v1841 = vsel %vm1713, %v1471, %v1777
    %v1842 = vsel %vm1714, %v1474, %v1778
    %v1843 = vsel %vm1715, %v1479, %v1779
    %v1844 = vsel %vm1716, %v1482, %v1780
    %v1845 = vsel %vm1717, %v1487, %v1781
    %v1846 = vsel %vm1718, %v1490, %v1782
    %v1847 = vsel %vm1719, %v1495, %v1783
    %v1848 = vsel %vm1720, %v1498, %v1784
    %v1849 = vsel %vm1721, %v1503, %v1785
    %v1850 = vsel %vm1722, %v1506, %v1786
    %v1851 = vsel %vm1723, %v1511, %v1787
    %v1852 = vsel %vm1724, %v1514, %v1788
    %v1853 = vsel %vm1725, %v1519, %v1789
    %v1854 = vsel %vm1726, %v1522, %v1790
    %v1855 = vsel %vm1727, %v1527, %v1791
    %v1856 = vsel %vm1728, %v1530, %v1792
    %v1857 = vsel %vm1729, %v1535, %v1793
    %v1858 = vsel %vm1730, %v1538, %v1794
    %v1859 = vsel %vm1731, %v1543, %v1795
    %v1860 = vsel %vm1732, %v1546, %v1796
    %v1861 = vsel %vm1733, %v1551, %v1797
    %v1862 = vsel %vm1734, %v1554, %v1798
    %v1863 = vsel %vm1735, %v1559, %v1799
    %v1864 = vsel %vm1736, %v1562, %v1800
    %v1865 = vsel %vm1737, %v1567, %v1801
    %v1866 = vsel %vm1738, %v1570, %v1802
    %v1867 = vsel %vm1739, %v1575, %v1803
    %v1868 = vsel %vm1740, %v1578, %v1804
    %v1869 = vsel %vm1741, %v1583, %v1805
    %v1870 = vsel %vm1742, %v1586, %v1806
    %v1871 = vsel %vm1743, %v1591, %v1807
    %v1872 = vsel %vm1744, %v1594, %v1808
    %v1873 = vsel %vm1745, %v1599, %v1809
    %v1874 = vsel %vm1746, %v1602, %v1810
    %v1875 = vsel %vm1747, %v1607, %v1811
    %v1876 = vsel %vm1748, %v1610, %v1812
    %v1877 = vsel %vm1749, %v1615, %v1813
    %v1878 = vsel %vm1750, %v1618, %v1814
    %v1879 = vsel %vm1751, %v1623, %v1815
    %v1880 = vsel %vm1752, %v1626, %v1816
    %v1881 = vsel %vm1753, %v1631, %v1817
    %v1882 = vsel %vm1754, %v1634, %v1818
    %v1883 = vsel %vm1755, %v1639, %v1819
    %v1884 = vsel %vm1756, %v1642, %v1820
    %v1885 = vsel %vm1757, %v1647, %v1821
    %v1886 = vsel %vm1758, %v1650, %v1822
    %v1887 = vsel %vm1759, %v1655, %v1823
    %v1888 = vsel %vm1760, %v1658, %v1824
    %v1889 = vsel %vm1761, %v1663, %v1825
    %v1890 = vsel %vm1762, %v1666, %v1826
    %v1891 = vsel %vm1763, %v1671, %v1827
    %v1892 = vsel %vm1764, %v1674, %v1828
    %v1893 = vsel %vm1765, %v1679, %v1829
    %v1894 = vsel %vm1766, %v1682, %v1830
    %v1895 = vsel %vm1767, %v1687, %v1831
    %v1896 = vsel %vm1768, %v1690, %v1832
    %v1897 = vsel %vm1769, %v1695, %v1833
    %v1898 = vsel %vm1770, %v1698, %v1834
    %v1899 = vsel %vm1771, %v1703, %v1835
    %v1900 = vsel %vm1772, %v1706, %v1836
    %v1901 = vld [vmem:[%s7] sm:$0x1]
    %v1902 = vld [vmem:[#allocation2] sm:$0x1]
    %1904 = vset.pattern.permute.xlu0 0
    %1905 = vperm.xlu0 %1904, %v1902
    %v1906 = vpop.permute.xlu0 %1905
    %v1908 = vlaneseq
    %v1909 = vshrl.u32 %v1908, 7
    %v1910 = vsub.s32 0, %v1909
    %v1911 = vrot.slane %v1906, %v1910
    %1912 = vmatprep.subr.mxu0 0.0
    %1913 = vmatpush1.xpose.msra.mxu0 %v1837
    %1914 = vmatprep.subr.mxu0 0.0
    %1915 = vmatpush1.xpose.msra.mxu0 %v1838
    %1916 = vmatprep.subr.mxu0 0.0
    %1917 = vmatpush1.xpose.msra.mxu0 %v1839
    %1918 = vmatprep.subr.mxu0 0.0
    %1919 = vmatpush1.xpose.msra.mxu0 %v1840
    %1920 = vmatprep.subr.mxu0 0.0
    %1921 = vmatpush1.xpose.msra.mxu0 %v1841
    %1922 = vmatprep.subr.mxu0 0.0
    %1923 = vmatpush1.xpose.msra.mxu0 %v1842
    %1924 = vmatprep.subr.mxu0 0.0
    %1925 = vmatpush1.xpose.msra.mxu0 %v1843
    %1926 = vmatprep.subr.mxu0 0.0
    %1927 = vmatpush1.xpose.msra.mxu0 %v1844
    %1928 = vmatprep.subr.mxu0 0.0
    %1929 = vmatpush1.xpose.msra.mxu0 %v1845
    %1930 = vmatprep.subr.mxu0 0.0
    %1931 = vmatpush1.xpose.msra.mxu0 %v1846
    %1932 = vmatprep.subr.mxu0 0.0
    %1933 = vmatpush1.xpose.msra.mxu0 %v1847
    %1934 = vmatprep.subr.mxu0 0.0
    %1935 = vmatpush1.xpose.msra.mxu0 %v1848
    %1936 = vmatprep.subr.mxu0 0.0
    %1937 = vmatpush1.xpose.msra.mxu0 %v1849
    %1938 = vmatprep.subr.mxu0 0.0
    %1939 = vmatpush1.xpose.msra.mxu0 %v1850
    %1940 = vmatprep.subr.mxu0 0.0
    %1941 = vmatpush1.xpose.msra.mxu0 %v1851
    %1942 = vmatprep.subr.mxu0 0.0
    %1943 = vmatpush1.xpose.msra.mxu0 %v1852
    %1944 = vmatprep.subr.mxu0 0.0
    %1945 = vmatpush1.xpose.msra.mxu0 %v1853
    %1946 = vmatprep.subr.mxu0 0.0
    %1947 = vmatpush1.xpose.msra.mxu0 %v1854
    %1948 = vmatprep.subr.mxu0 0.0
    %1949 = vmatpush1.xpose.msra.mxu0 %v1855
    %1950 = vmatprep.subr.mxu0 0.0
    %1951 = vmatpush1.xpose.msra.mxu0 %v1856
    %1952 = vmatprep.subr.mxu0 0.0
    %1953 = vmatpush1.xpose.msra.mxu0 %v1857
    %1954 = vmatprep.subr.mxu0 0.0
    %1955 = vmatpush1.xpose.msra.mxu0 %v1858
    %1956 = vmatprep.subr.mxu0 0.0
    %1957 = vmatpush1.xpose.msra.mxu0 %v1859
    %1958 = vmatprep.subr.mxu0 0.0
    %1959 = vmatpush1.xpose.msra.mxu0 %v1860
    %1960 = vmatprep.subr.mxu0 0.0
    %1961 = vmatpush1.xpose.msra.mxu0 %v1861
    %1962 = vmatprep.subr.mxu0 0.0
    %1963 = vmatpush1.xpose.msra.mxu0 %v1862
    %1964 = vmatprep.subr.mxu0 0.0
    %1965 = vmatpush1.xpose.msra.mxu0 %v1863
    %1966 = vmatprep.subr.mxu0 0.0
    %1967 = vmatpush1.xpose.msra.mxu0 %v1864
    %1968 = vmatprep.subr.mxu0 0.0
    %1969 = vmatpush1.xpose.msra.mxu0 %v1865
    %1970 = vmatprep.subr.mxu0 0.0
    %1971 = vmatpush1.xpose.msra.mxu0 %v1866
    %1972 = vmatprep.subr.mxu0 0.0
    %1973 = vmatpush1.xpose.msra.mxu0 %v1867
    %1974 = vmatprep.subr.mxu0 0.0
    %1975 = vmatpush1.xpose.msra.mxu0 %v1868
    %1976 = vmatprep.mubr.f32.mxu0 0.0
    %1977 = vmatmul.mubr.f32.gmra.mrb[0].mxu0 %v1901
    %v1978 = vpop.f32.mrb[0].mxu0
    %v1979 = vadd.f32 %v1911, %v1978
    %v1980 = vpop.f32.mrb[0].mxu0
    %v1981 = vadd.f32 %v1911, %v1980
    %1982 = vdwg.mxu0
    %1983 = vmatprep.subr.mxu0 0.0
    %1984 = vmatpush1.xpose.msra.mxu0 %v1869
    %1985 = vmatprep.subr.mxu0 0.0
    %1986 = vmatpush1.xpose.msra.mxu0 %v1870
    %1987 = vmatprep.subr.mxu0 0.0
    %1988 = vmatpush1.xpose.msra.mxu0 %v1871
    %1989 = vmatprep.subr.mxu0 0.0
    %1990 = vmatpush1.xpose.msra.mxu0 %v1872
    %1991 = vmatprep.subr.mxu0 0.0
    %1992 = vmatpush1.xpose.msra.mxu0 %v1873
    %1993 = vmatprep.subr.mxu0 0.0
    %1994 = vmatpush1.xpose.msra.mxu0 %v1874
    %1995 = vmatprep.subr.mxu0 0.0
    %1996 = vmatpush1.xpose.msra.mxu0 %v1875
    %1997 = vmatprep.subr.mxu0 0.0
    %1998 = vmatpush1.xpose.msra.mxu0 %v1876
    %1999 = vmatprep.subr.mxu0 0.0
    %2000 = vmatpush1.xpose.msra.mxu0 %v1877
    %2001 = vmatprep.subr.mxu0 0.0
    %2002 = vmatpush1.xpose.msra.mxu0 %v1878
    %2003 = vmatprep.subr.mxu0 0.0
    %2004 = vmatpush1.xpose.msra.mxu0 %v1879
    %2005 = vmatprep.subr.mxu0 0.0
    %2006 = vmatpush1.xpose.msra.mxu0 %v1880
    %2007 = vmatprep.subr.mxu0 0.0
    %2008 = vmatpush1.xpose.msra.mxu0 %v1881
    %2009 = vmatprep.subr.mxu0 0.0
    %2010 = vmatpush1.xpose.msra.mxu0 %v1882
    %2011 = vmatprep.subr.mxu0 0.0
    %2012 = vmatpush1.xpose.msra.mxu0 %v1883
    %2013 = vmatprep.subr.mxu0 0.0
    %2014 = vmatpush1.xpose.msra.mxu0 %v1884
    %2015 = vmatprep.subr.mxu0 0.0
    %2016 = vmatpush1.xpose.msra.mxu0 %v1885
    %2017 = vmatprep.subr.mxu0 0.0
    %2018 = vmatpush1.xpose.msra.mxu0 %v1886
    %2019 = vmatprep.subr.mxu0 0.0
    %2020 = vmatpush1.xpose.msra.mxu0 %v1887
    %2021 = vmatprep.subr.mxu0 0.0
    %2022 = vmatpush1.xpose.msra.mxu0 %v1888
    %2023 = vmatprep.subr.mxu0 0.0
    %2024 = vmatpush1.xpose.msra.mxu0 %v1889
    %2025 = vmatprep.subr.mxu0 0.0
    %2026 = vmatpush1.xpose.msra.mxu0 %v1890
    %2027 = vmatprep.subr.mxu0 0.0
    %2028 = vmatpush1.xpose.msra.mxu0 %v1891
    %2029 = vmatprep.subr.mxu0 0.0
    %2030 = vmatpush1.xpose.msra.mxu0 %v1892
    %2031 = vmatprep.subr.mxu0 0.0
    %2032 = vmatpush1.xpose.msra.mxu0 %v1893
    %2033 = vmatprep.subr.mxu0 0.0
    %2034 = vmatpush1.xpose.msra.mxu0 %v1894
    %2035 = vmatprep.subr.mxu0 0.0
    %2036 = vmatpush1.xpose.msra.mxu0 %v1895
    %2037 = vmatprep.subr.mxu0 0.0
    %2038 = vmatpush1.xpose.msra.mxu0 %v1896
    %2039 = vmatprep.subr.mxu0 0.0
    %2040 = vmatpush1.xpose.msra.mxu0 %v1897
    %2041 = vmatprep.subr.mxu0 0.0
    %2042 = vmatpush1.xpose.msra.mxu0 %v1898
    %2043 = vmatprep.subr.mxu0 0.0
    %2044 = vmatpush1.xpose.msra.mxu0 %v1899
    %2045 = vmatprep.subr.mxu0 0.0
    %2046 = vmatpush1.xpose.msra.mxu0 %v1900
    %2047 = vmatprep.mubr.f32.mxu0 0.0
    %2048 = vmatmul.mubr.f32.gmra.mrb[0].mxu0 %v1901
    %v2049 = vpop.f32.mrb[0].mxu0
    %v2050 = vadd.f32 %v1911, %v2049
    %v2051 = vpop.f32.mrb[0].mxu0
    %v2052 = vadd.f32 %v1911, %v2051
    %2053 = vdwg.mxu0
    %v2058 = vcombine.low %v1979, %v1981
    %v2059 = vcombine.low %v2050, %v2052
    %v2061 = vunpack.c.l.s4 1966171168
    %v2062 = vunpack.c.0.s8 %v2061
    %v2063 = vlaneseq
    %v2064 = vshrl.u32 %v2063, 7
    %v2065 = vsub.s32 %v2062, %v2064
    %v2066 = vrot.slane %v2058, %v2065
    %v2068 = vunpack.c.l.s4 1966171168
    %v2069 = vunpack.c.0.s8 %v2068
    %v2070 = vlaneseq
    %v2071 = vshrl.u32 %v2070, 7
    %v2072 = vsub.s32 %v2069, %v2071
    %v2073 = vrot.slane %v2059, %v2072
    %v2074 = vcombine.low %v2066, %v2073
    %v2076 = vunpack.c.l.s4 1966171168
    %v2077 = vunpack.c.0.s8 %v2076
    %v2078 = vlaneseq
    %v2079 = vshrl.u32 %v2078, 7
    %v2080 = vsub.s32 %v2077, %v2079
    %v2081 = vrot.slane %v2074, %v2080
    %v2083 = vlaneseq
    %vm2084 = vcmp.ge.s32.totalorder %v2083, 0
    %vm2085 = vcmp.lt.s32.totalorder %v2083, 512
    %vm2086 = vmand %vm2084, %vm2085
    %2087 = vst.msk [vmem:[#allocation3] sm:$0xf] %vm2086, %v2081
    // Predicated region
    $region38: #{tpu_custom_call.1} parent=1 // pred_check
      _
    $region39: #{tpu_custom_call.1} parent=1 // pred_check_branch
      %2089 = sbr.rel (0) target = $region41
    $region40: #{tpu_custom_call.1} parent=1 // pred_region
      %s2091 = ssub.s32 64, 64
      %2092 = vsyncadd [#allocation4], %s2091
      %s2094 = sshll.u32 [#allocation3], 4
      %s2095 = int_to_ptr.vmem [resolvable:$true] %s2094
      %2097 = dma.vmem_to_hbm [thread:$0]  %s2095, 64, %s9, [#allocation4]
    $region41: #{tpu_custom_call.1} parent=1 // pred_fallthru
      _
    // Predicated region
    $region42: #{tpu_custom_call.1} parent=1 // pred_check
      _
    $region43: #{tpu_custom_call.1} parent=1 // pred_check_branch
      %2099 = sbr.rel (0) target = $region45
    $region44: #{tpu_custom_call.1} parent=1 // pred_region
      %2100 = dma.done [#allocation4], 64
    $region45: #{tpu_custom_call.1} parent=1 // pred_fallthru
      _
    %2101 = vsyncpa [#allocation4], 1

</llo_original>
